<compile_context>
chip_gen: v6e
topology: v6e:2x2x1
jax: 0.10.0
libtpu: 0.0.40
codegen_flags: <defaults>
</compile_context>

<pallas_src>
import numpy as np

import jax
import jax.numpy as jnp
from jax.experimental import pallas as pl
from jax.experimental.pallas import tpu as pltpu


def _round_up(x, m):
    return ((x + m - 1) // m) * m


# --------------------------------------------------------------------------- #
# Pallas kernel: fused-gate GRU recurrence for one batch block.
# --------------------------------------------------------------------------- #
def gru_kernel(x_ref, wih_ref, whh_ref, gbias_ref, bhn_ref, out_ref, gi_ref):
    # x_ref:    (T*Bb, Ep)   time-major embedded inputs (batch rows contiguous per step)
    # wih_ref:  (Ep, 3Hp)    [W_ir^T | W_iz^T | W_in^T]
    # whh_ref:  (Hp, 3Hp)    [W_hr^T | W_hz^T | W_hn^T]
    # gbias_ref:(1, 3Hp)     [b_ir+b_hr | b_iz+b_hz | b_in]
    # bhn_ref:  (1, Hp)      b_hn (kept separate: n = tanh(gi_n + r*(gh_n + b_hn)))
    # out_ref:  (Bb, Hp)     last-timestep hidden state for this batch block
    # gi_ref:   (T*Bb, 3Hp)  VMEM scratch holding the precomputed input gates
    TB, _ = x_ref.shape
    Bb, Hp = out_ref.shape
    T = TB // Bb

    # Stage 1 (fully parallel): hoisted input projection for all timesteps,
    # one big MXU matmul + folded biases.
    gi_ref[...] = (
        jnp.dot(x_ref[...], wih_ref[...], preferred_element_type=jnp.float32)
        + gbias_ref[...]
    )

    whh = whh_ref[...]                                   # VMEM-resident fused weights
    b_hn = jnp.broadcast_to(bhn_ref[...], (Bb, Hp))      # broadcast hoisted out of loop

    # Stage 2 (sequential): the recurrence. One fused h @ (Hp, 3Hp) matmul per
    # step plus elementwise gate math; gate splits are static 128-lane slices.
    def step(t, h):
        row = pl.multiple_of(t * Bb, 8)
        gi = gi_ref[pl.ds(row, Bb), :]                                    # (Bb, 3Hp)
        gh = jnp.dot(h, whh, preferred_element_type=jnp.float32)          # (Bb, 3Hp)
        r = jax.nn.sigmoid(gi[:, 0 * Hp:1 * Hp] + gh[:, 0 * Hp:1 * Hp])
        z = jax.nn.sigmoid(gi[:, 1 * Hp:2 * Hp] + gh[:, 1 * Hp:2 * Hp])
        n = jnp.tanh(gi[:, 2 * Hp:3 * Hp] + r * (gh[:, 2 * Hp:3 * Hp] + b_hn))
        return (1.0 - z) * n + z * h

    h0 = jnp.zeros((Bb, Hp), jnp.float32)
    h_last = jax.lax.fori_loop(0, T, step, h0, unroll=True)
    out_ref[...] = h_last


def gru_last_hidden(x, wih_f, whh_f, gbias, bhn, *, Bb):
    # x: (num_bb, T*Bb, Ep); returns (num_bb, Bb, Hp) last hidden per batch block.
    num_bb, TB, Ep = x.shape
    Hp = bhn.shape[1]
    H3 = whh_f.shape[1]
    return pl.pallas_call(
        gru_kernel,
        out_shape=jax.ShapeDtypeStruct((num_bb, Bb, Hp), jnp.float32),
        grid=(num_bb,),
        in_specs=[
            pl.BlockSpec((None, TB, Ep), lambda b: (b, 0, 0)),   # per-block inputs
            pl.BlockSpec((Ep, H3), lambda b: (0, 0)),            # fused W_ih (constant)
            pl.BlockSpec((Hp, H3), lambda b: (0, 0)),            # fused W_hh (constant)
            pl.BlockSpec((1, H3), lambda b: (0, 0)),             # folded gate biases
            pl.BlockSpec((1, Hp), lambda b: (0, 0)),             # b_hn
        ],
        out_specs=pl.BlockSpec((None, Bb, Hp), lambda b: (b, 0, 0)),
        scratch_shapes=[pltpu.VMEM((TB, H3), jnp.float32)],
        compiler_params=pltpu.CompilerParams(
            dimension_semantics=("parallel",),        # batch blocks are independent
            vmem_limit_bytes=32 * 1024 * 1024,
        ),
    )(x, wih_f, whh_f, gbias, bhn)


# --------------------------------------------------------------------------- #
# Parameter preparation (one-time glue, outside the kernel).
# --------------------------------------------------------------------------- #
def prepare_gru_kernel_params(w_ih, w_hh, b_ih, b_hh, E, H):
    """Fuse PyTorch-layout GRU weights into lane-dense, 128-padded operands."""
    Ep = _round_up(E, 128)
    Hp = _round_up(H, 128)
    w_ih_g = w_ih.reshape(3, H, E)     # gate order [r, z, n]
    w_hh_g = w_hh.reshape(3, H, H)
    b_ih_g = b_ih.reshape(3, H)
    b_hh_g = b_hh.reshape(3, H)

    def pad2(m, rows, cols):
        return jnp.pad(m, ((0, rows - m.shape[0]), (0, cols - m.shape[1])))

    wih_f = jnp.concatenate([pad2(w_ih_g[g].T, Ep, Hp) for g in range(3)], axis=1)  # (Ep, 3Hp)
    whh_f = jnp.concatenate([pad2(w_hh_g[g].T, Hp, Hp) for g in range(3)], axis=1)  # (Hp, 3Hp)
    gb_parts = [b_ih_g[0] + b_hh_g[0], b_ih_g[1] + b_hh_g[1], b_ih_g[2]]
    gbias = jnp.concatenate([jnp.pad(p, (0, Hp - H)) for p in gb_parts])[None, :]   # (1, 3Hp)
    bhn = jnp.pad(b_hh_g[2], (0, Hp - H))[None, :]                                  # (1, Hp)
    return wih_f, whh_f, gbias, bhn


def init_params(key, cate_input_size, cate_embedding_dim, cate_hidden_size):
    E, H = cate_embedding_dim, cate_hidden_size
    k_emb, k_wih, k_whh, k_bih, k_bhh = jax.random.split(key, 5)

    # nn.Embedding default init N(0,1), padding_idx=0 row zeroed.
    emb = jax.random.normal(k_emb, (cate_input_size + 1, E), dtype=jnp.float32)
    emb = emb.at[0].set(0.0)

    # nn.GRU default init U(-1/sqrt(H), 1/sqrt(H)), PyTorch layout (3H, E)/(3H, H), gates [r,z,n].
    bound = 1.0 / np.sqrt(H)
    w_ih = jax.random.uniform(k_wih, (3 * H, E), jnp.float32, -bound, bound)
    w_hh = jax.random.uniform(k_whh, (3 * H, H), jnp.float32, -bound, bound)
    b_ih = jax.random.uniform(k_bih, (3 * H,), jnp.float32, -bound, bound)
    b_hh = jax.random.uniform(k_bhh, (3 * H,), jnp.float32, -bound, bound)

    wih_f, whh_f, gbias, bhn = prepare_gru_kernel_params(w_ih, w_hh, b_ih, b_hh, E, H)
    return {
        "embedding": emb,
        "w_ih": w_ih, "w_hh": w_hh, "b_ih": b_ih, "b_hh": b_hh,
        "wih_f": wih_f, "whh_f": whh_f, "gbias": gbias, "bhn": bhn,
        "hidden_size": H, "embedding_dim": E,
    }


# --------------------------------------------------------------------------- #
# Forward pass (matches CATENNSimplest.forward: returns output[:, -1, :] == h_T).
# --------------------------------------------------------------------------- #
def catenn_simplest_forward(cate_short_batch, actionNum_short_batch, params):
    del actionNum_short_batch  # unused in the PyTorch forward as well
    # Embedding gather (padding_idx=0 row is zero) — plain-JAX glue.
    x_emb = jnp.take(params["embedding"], cate_short_batch, axis=0).astype(jnp.float32)
    B, T, E = x_emb.shape
    H = params["hidden_size"]
    Ep = params["wih_f"].shape[0]
    Hp = params["bhn"].shape[1]

    # Batch blocking: pad to 8 sublanes; block at 128 rows for large batch so
    # the "parallel" grid axis can shard across v7x's two TensorCores.
    if B <= 128:
        Bb, num_bb = _round_up(B, 8), 1
    else:
        Bb, num_bb = 128, pl.cdiv(B, 128)
    Bp = Bb * num_bb

    # (B,T,E) -> zero-pad -> (num_bb, T*Bb, Ep), time-major within each block.
    x = jnp.pad(x_emb, ((0, Bp - B), (0, 0), (0, Ep - E)))
    x = x.reshape(num_bb, Bb, T, Ep).transpose(0, 2, 1, 3).reshape(num_bb, T * Bb, Ep)

    h = gru_last_hidden(x, params["wih_f"], params["whh_f"],
                        params["gbias"], params["bhn"], Bb=Bb)
    return h.reshape(Bp, Hp)[:B, :H]


def reference_forward(cate_short_batch, params):
    """Pure-JAX reference (lax.scan GRU, PyTorch gate equations), for checking."""
    x_emb = jnp.take(params["embedding"], cate_short_batch, axis=0).astype(jnp.float32)
    B, T, E = x_emb.shape
    H = params["hidden_size"]
    w_ih = params["w_ih"].reshape(3, H, E)
    w_hh = params["w_hh"].reshape(3, H, H)
    b_ih = params["b_ih"].reshape(3, H)
    b_hh = params["b_hh"].reshape(3, H)

    def step(h, x_t):
        r = jax.nn.sigmoid(x_t @ w_ih[0].T + b_ih[0] + h @ w_hh[0].T + b_hh[0])
        z = jax.nn.sigmoid(x_t @ w_ih[1].T + b_ih[1] + h @ w_hh[1].T + b_hh[1])
        n = jnp.tanh(x_t @ w_ih[2].T + b_ih[2] + r * (h @ w_hh[2].T + b_hh[2]))
        return (1.0 - z) * n + z * h, None

    h0 = jnp.zeros((B, H), jnp.float32)
    h_last, _ = jax.lax.scan(step, h0, jnp.transpose(x_emb, (1, 0, 2)))
    return h_last


if __name__ == "__main__":
    # Small, self-consistent config (shared embedding implies E == H, input == output).
    B, T = 2, 8
    cate_input_size = 20
    cate_output_size = 20
    cate_embedding_dim = 32
    cate_hidden_size = 32

    key = jax.random.PRNGKey(0)
    k_params, k_idx, k_act = jax.random.split(key, 3)

    params = init_params(k_params, cate_input_size, cate_embedding_dim, cate_hidden_size)

    cate_short_batch = jax.random.randint(
        k_idx, (B, T), minval=0, maxval=cate_input_size + 1, dtype=jnp.int32
    )
    actionNum_short_batch = jax.random.randint(
        k_act, (B,), minval=1, maxval=T + 1, dtype=jnp.int32
    )

    out = catenn_simplest_forward(cate_short_batch, actionNum_short_batch, params)
    out = jax.block_until_ready(out)

    ref = jax.block_until_ready(reference_forward(cate_short_batch, params))
    assert out.shape == (B, cate_hidden_size)
    np.testing.assert_allclose(np.asarray(out), np.asarray(ref), rtol=1e-5, atol=1e-5)

    print("KERNEL_OK")
</pallas_src>

<mosaic_0001>
module attributes {stable_mosaic.version = 11 : i64} {
  func.func @gru_kernel(%arg0: i32, %arg1: memref<1x64x128xf32, #tpu.memory_space<vmem>>, %arg2: memref<128x384xf32, #tpu.memory_space<vmem>>, %arg3: memref<128x384xf32, #tpu.memory_space<vmem>>, %arg4: memref<1x384xf32, #tpu.memory_space<vmem>>, %arg5: memref<1x128xf32, #tpu.memory_space<vmem>>, %arg6: memref<1x8x128xf32, #tpu.memory_space<vmem>>, %arg7: memref<64x384xf32, #tpu.memory_space<vmem>>) attributes {dimension_semantics = [#tpu.dimension_semantics<parallel>], iteration_bounds = array<i64: 1>, scalar_prefetch = 0 : i64, scratch_operands = 1 : i64, tpu.core_type = #tpu.core_type<tc>, window_params = [{transform_indices = @transform_0, window_bounds = array<i64: 1, 64, 128>}, {pipeline_mode = #tpu.pipeline_mode<synchronous>, transform_indices = @transform_1, window_bounds = array<i64: 128, 384>}, {pipeline_mode = #tpu.pipeline_mode<synchronous>, transform_indices = @transform_2, window_bounds = array<i64: 128, 384>}, {pipeline_mode = #tpu.pipeline_mode<synchronous>, transform_indices = @transform_3, window_bounds = array<i64: 1, 384>}, {pipeline_mode = #tpu.pipeline_mode<synchronous>, transform_indices = @transform_4, window_bounds = array<i64: 1, 128>}, {transform_indices = @transform_5, window_bounds = array<i64: 1, 8, 128>}]} {
    %c0 = arith.constant 0 : index
    %c0_0 = arith.constant 0 : index
    %c0_1 = arith.constant 0 : index
    %0 = vector.load %arg1[%c0, %c0_0, %c0_1] : memref<1x64x128xf32, #tpu.memory_space<vmem>>, vector<1x64x128xf32>
    %1 = vector.shape_cast %0 : vector<1x64x128xf32> to vector<64x128xf32>
    %c0_2 = arith.constant 0 : index
    %c0_3 = arith.constant 0 : index
    %2 = vector.load %arg2[%c0_2, %c0_3] : memref<128x384xf32, #tpu.memory_space<vmem>>, vector<128x384xf32>
    %cst = arith.constant dense<0.000000e+00> : vector<64x384xf32>
    %3 = tpu.matmul %1, %2, %cst {dimension_numbers = #tpu.dot_dimension_numbers<[1], [0], [0], [1], [0, 0, 1, 1], [], []>} : vector<64x128xf32>, vector<128x384xf32>, vector<64x384xf32> -> vector<64x384xf32>
    %c0_4 = arith.constant 0 : index
    %c0_5 = arith.constant 0 : index
    %4 = vector.load %arg4[%c0_4, %c0_5] : memref<1x384xf32, #tpu.memory_space<vmem>>, vector<1x384xf32>
    %5 = vector.broadcast %4 : vector<1x384xf32> to vector<64x384xf32>
    %6 = arith.addf %3, %5 : vector<64x384xf32>
    %c0_6 = arith.constant 0 : index
    %c0_7 = arith.constant 0 : index
    %7 = vector.load %arg7[%c0_6, %c0_7] : memref<64x384xf32, #tpu.memory_space<vmem>>, vector<64x384xf32>
    tpu.vector_store %arg7[%c0_6, %c0_7], %6 {strides = array<i32>} : memref<64x384xf32, #tpu.memory_space<vmem>>, vector<64x384xf32>,
    %c0_8 = arith.constant 0 : index
    %c0_9 = arith.constant 0 : index
    %8 = vector.load %arg3[%c0_8, %c0_9] : memref<128x384xf32, #tpu.memory_space<vmem>>, vector<128x384xf32>
    %c0_10 = arith.constant 0 : index
    %c0_11 = arith.constant 0 : index
    %9 = vector.load %arg5[%c0_10, %c0_11] : memref<1x128xf32, #tpu.memory_space<vmem>>, vector<1x128xf32>
    %10 = vector.shape_cast %9 : vector<1x128xf32> to vector<1x128xf32>
    %11 = vector.broadcast %10 : vector<1x128xf32> to vector<8x128xf32>
    %cst_12 = arith.constant 0.000000e+00 : f32
    %12 = vector.broadcast %cst_12 : f32 to vector<8x128xf32>
    %c0_i32 = arith.constant 0 : i32
    %c8_i32 = arith.constant 8 : i32
    %13 = arith.muli %c0_i32, %c8_i32 : i32
    %14 = tpu.assume_multiple %13, 8 : i32
    %15 = arith.index_cast %14 : i32 to index
    %c0_13 = arith.constant 0 : index
    %16 = vector.load %arg7[%15, %c0_13] : memref<64x384xf32, #tpu.memory_space<vmem>>, vector<8x384xf32>
    %cst_14 = arith.constant dense<0.000000e+00> : vector<8x384xf32>
    %17 = tpu.matmul %12, %8, %cst_14 {dimension_numbers = #tpu.dot_dimension_numbers<[1], [0], [0], [1], [0, 0, 1, 1], [], []>} : vector<8x128xf32>, vector<128x384xf32>, vector<8x384xf32> -> vector<8x384xf32>
    %18 = vector.extract_strided_slice %16 {offsets = [0, 0], sizes = [8, 128], strides = [1, 1]} : vector<8x384xf32> to vector<8x128xf32>
    %19 = vector.extract_strided_slice %17 {offsets = [0, 0], sizes = [8, 128], strides = [1, 1]} : vector<8x384xf32> to vector<8x128xf32>
    %20 = arith.addf %18, %19 : vector<8x128xf32>
    %21 = arith.negf %20 : vector<8x128xf32>
    %22 = math.exp %21 : vector<8x128xf32>
    %cst_15 = arith.constant 1.000000e+00 : f32
    %23 = vector.broadcast %cst_15 : f32 to vector<8x128xf32>
    %24 = arith.addf %23, %22 : vector<8x128xf32>
    %25 = arith.divf %23, %24 : vector<8x128xf32>
    %26 = vector.extract_strided_slice %16 {offsets = [0, 128], sizes = [8, 128], strides = [1, 1]} : vector<8x384xf32> to vector<8x128xf32>
    %27 = vector.extract_strided_slice %17 {offsets = [0, 128], sizes = [8, 128], strides = [1, 1]} : vector<8x384xf32> to vector<8x128xf32>
    %28 = arith.addf %26, %27 : vector<8x128xf32>
    %29 = arith.negf %28 : vector<8x128xf32>
    %30 = math.exp %29 : vector<8x128xf32>
    %cst_16 = arith.constant 1.000000e+00 : f32
    %31 = vector.broadcast %cst_16 : f32 to vector<8x128xf32>
    %32 = arith.addf %31, %30 : vector<8x128xf32>
    %33 = arith.divf %31, %32 : vector<8x128xf32>
    %34 = vector.extract_strided_slice %16 {offsets = [0, 256], sizes = [8, 128], strides = [1, 1]} : vector<8x384xf32> to vector<8x128xf32>
    %35 = vector.extract_strided_slice %17 {offsets = [0, 256], sizes = [8, 128], strides = [1, 1]} : vector<8x384xf32> to vector<8x128xf32>
    %36 = arith.addf %35, %11 : vector<8x128xf32>
    %37 = arith.mulf %25, %36 : vector<8x128xf32>
    %38 = arith.addf %34, %37 : vector<8x128xf32>
    %39 = math.tanh %38 : vector<8x128xf32>
    %cst_17 = arith.constant 1.000000e+00 : f32
    %40 = vector.broadcast %cst_17 : f32 to vector<8x128xf32>
    %41 = arith.subf %40, %33 : vector<8x128xf32>
    %42 = arith.mulf %41, %39 : vector<8x128xf32>
    %43 = arith.mulf %33, %12 : vector<8x128xf32>
    %44 = arith.addf %42, %43 : vector<8x128xf32>
    %c1_i32 = arith.constant 1 : i32
    %c8_i32_18 = arith.constant 8 : i32
    %45 = arith.muli %c1_i32, %c8_i32_18 : i32
    %46 = tpu.assume_multiple %45, 8 : i32
    %47 = arith.index_cast %46 : i32 to index
    %c0_19 = arith.constant 0 : index
    %48 = vector.load %arg7[%47, %c0_19] : memref<64x384xf32, #tpu.memory_space<vmem>>, vector<8x384xf32>
    %cst_20 = arith.constant dense<0.000000e+00> : vector<8x384xf32>
    %49 = tpu.matmul %44, %8, %cst_20 {dimension_numbers = #tpu.dot_dimension_numbers<[1], [0], [0], [1], [0, 0, 1, 1], [], []>} : vector<8x128xf32>, vector<128x384xf32>, vector<8x384xf32> -> vector<8x384xf32>
    %50 = vector.extract_strided_slice %48 {offsets = [0, 0], sizes = [8, 128], strides = [1, 1]} : vector<8x384xf32> to vector<8x128xf32>
    %51 = vector.extract_strided_slice %49 {offsets = [0, 0], sizes = [8, 128], strides = [1, 1]} : vector<8x384xf32> to vector<8x128xf32>
    %52 = arith.addf %50, %51 : vector<8x128xf32>
    %53 = arith.negf %52 : vector<8x128xf32>
    %54 = math.exp %53 : vector<8x128xf32>
    %cst_21 = arith.constant 1.000000e+00 : f32
    %55 = vector.broadcast %cst_21 : f32 to vector<8x128xf32>
    %56 = arith.addf %55, %54 : vector<8x128xf32>
    %57 = arith.divf %55, %56 : vector<8x128xf32>
    %58 = vector.extract_strided_slice %48 {offsets = [0, 128], sizes = [8, 128], strides = [1, 1]} : vector<8x384xf32> to vector<8x128xf32>
    %59 = vector.extract_strided_slice %49 {offsets = [0, 128], sizes = [8, 128], strides = [1, 1]} : vector<8x384xf32> to vector<8x128xf32>
    %60 = arith.addf %58, %59 : vector<8x128xf32>
    %61 = arith.negf %60 : vector<8x128xf32>
    %62 = math.exp %61 : vector<8x128xf32>
    %cst_22 = arith.constant 1.000000e+00 : f32
    %63 = vector.broadcast %cst_22 : f32 to vector<8x128xf32>
    %64 = arith.addf %63, %62 : vector<8x128xf32>
    %65 = arith.divf %63, %64 : vector<8x128xf32>
    %66 = vector.extract_strided_slice %48 {offsets = [0, 256], sizes = [8, 128], strides = [1, 1]} : vector<8x384xf32> to vector<8x128xf32>
    %67 = vector.extract_strided_slice %49 {offsets = [0, 256], sizes = [8, 128], strides = [1, 1]} : vector<8x384xf32> to vector<8x128xf32>
    %68 = arith.addf %67, %11 : vector<8x128xf32>
    %69 = arith.mulf %57, %68 : vector<8x128xf32>
    %70 = arith.addf %66, %69 : vector<8x128xf32>
    %71 = math.tanh %70 : vector<8x128xf32>
    %cst_23 = arith.constant 1.000000e+00 : f32
    %72 = vector.broadcast %cst_23 : f32 to vector<8x128xf32>
    %73 = arith.subf %72, %65 : vector<8x128xf32>
    %74 = arith.mulf %73, %71 : vector<8x128xf32>
    %75 = arith.mulf %65, %44 : vector<8x128xf32>
    %76 = arith.addf %74, %75 : vector<8x128xf32>
    %c2_i32 = arith.constant 2 : i32
    %c8_i32_24 = arith.constant 8 : i32
    %77 = arith.muli %c2_i32, %c8_i32_24 : i32
    %78 = tpu.assume_multiple %77, 8 : i32
    %79 = arith.index_cast %78 : i32 to index
    %c0_25 = arith.constant 0 : index
    %80 = vector.load %arg7[%79, %c0_25] : memref<64x384xf32, #tpu.memory_space<vmem>>, vector<8x384xf32>
    %cst_26 = arith.constant dense<0.000000e+00> : vector<8x384xf32>
    %81 = tpu.matmul %76, %8, %cst_26 {dimension_numbers = #tpu.dot_dimension_numbers<[1], [0], [0], [1], [0, 0, 1, 1], [], []>} : vector<8x128xf32>, vector<128x384xf32>, vector<8x384xf32> -> vector<8x384xf32>
    %82 = vector.extract_strided_slice %80 {offsets = [0, 0], sizes = [8, 128], strides = [1, 1]} : vector<8x384xf32> to vector<8x128xf32>
    %83 = vector.extract_strided_slice %81 {offsets = [0, 0], sizes = [8, 128], strides = [1, 1]} : vector<8x384xf32> to vector<8x128xf32>
    %84 = arith.addf %82, %83 : vector<8x128xf32>
    %85 = arith.negf %84 : vector<8x128xf32>
    %86 = math.exp %85 : vector<8x128xf32>
    %cst_27 = arith.constant 1.000000e+00 : f32
    %87 = vector.broadcast %cst_27 : f32 to vector<8x128xf32>
    %88 = arith.addf %87, %86 : vector<8x128xf32>
    %89 = arith.divf %87, %88 : vector<8x128xf32>
    %90 = vector.extract_strided_slice %80 {offsets = [0, 128], sizes = [8, 128], strides = [1, 1]} : vector<8x384xf32> to vector<8x128xf32>
    %91 = vector.extract_strided_slice %81 {offsets = [0, 128], sizes = [8, 128], strides = [1, 1]} : vector<8x384xf32> to vector<8x128xf32>
    %92 = arith.addf %90, %91 : vector<8x128xf32>
    %93 = arith.negf %92 : vector<8x128xf32>
    %94 = math.exp %93 : vector<8x128xf32>
    %cst_28 = arith.constant 1.000000e+00 : f32
    %95 = vector.broadcast %cst_28 : f32 to vector<8x128xf32>
    %96 = arith.addf %95, %94 : vector<8x128xf32>
    %97 = arith.divf %95, %96 : vector<8x128xf32>
    %98 = vector.extract_strided_slice %80 {offsets = [0, 256], sizes = [8, 128], strides = [1, 1]} : vector<8x384xf32> to vector<8x128xf32>
    %99 = vector.extract_strided_slice %81 {offsets = [0, 256], sizes = [8, 128], strides = [1, 1]} : vector<8x384xf32> to vector<8x128xf32>
    %100 = arith.addf %99, %11 : vector<8x128xf32>
    %101 = arith.mulf %89, %100 : vector<8x128xf32>
    %102 = arith.addf %98, %101 : vector<8x128xf32>
    %103 = math.tanh %102 : vector<8x128xf32>
    %cst_29 = arith.constant 1.000000e+00 : f32
    %104 = vector.broadcast %cst_29 : f32 to vector<8x128xf32>
    %105 = arith.subf %104, %97 : vector<8x128xf32>
    %106 = arith.mulf %105, %103 : vector<8x128xf32>
    %107 = arith.mulf %97, %76 : vector<8x128xf32>
    %108 = arith.addf %106, %107 : vector<8x128xf32>
    %c3_i32 = arith.constant 3 : i32
    %c8_i32_30 = arith.constant 8 : i32
    %109 = arith.muli %c3_i32, %c8_i32_30 : i32
    %110 = tpu.assume_multiple %109, 8 : i32
    %111 = arith.index_cast %110 : i32 to index
    %c0_31 = arith.constant 0 : index
    %112 = vector.load %arg7[%111, %c0_31] : memref<64x384xf32, #tpu.memory_space<vmem>>, vector<8x384xf32>
    %cst_32 = arith.constant dense<0.000000e+00> : vector<8x384xf32>
    %113 = tpu.matmul %108, %8, %cst_32 {dimension_numbers = #tpu.dot_dimension_numbers<[1], [0], [0], [1], [0, 0, 1, 1], [], []>} : vector<8x128xf32>, vector<128x384xf32>, vector<8x384xf32> -> vector<8x384xf32>
    %114 = vector.extract_strided_slice %112 {offsets = [0, 0], sizes = [8, 128], strides = [1, 1]} : vector<8x384xf32> to vector<8x128xf32>
    %115 = vector.extract_strided_slice %113 {offsets = [0, 0], sizes = [8, 128], strides = [1, 1]} : vector<8x384xf32> to vector<8x128xf32>
    %116 = arith.addf %114, %115 : vector<8x128xf32>
    %117 = arith.negf %116 : vector<8x128xf32>
    %118 = math.exp %117 : vector<8x128xf32>
    %cst_33 = arith.constant 1.000000e+00 : f32
    %119 = vector.broadcast %cst_33 : f32 to vector<8x128xf32>
    %120 = arith.addf %119, %118 : vector<8x128xf32>
    %121 = arith.divf %119, %120 : vector<8x128xf32>
    %122 = vector.extract_strided_slice %112 {offsets = [0, 128], sizes = [8, 128], strides = [1, 1]} : vector<8x384xf32> to vector<8x128xf32>
    %123 = vector.extract_strided_slice %113 {offsets = [0, 128], sizes = [8, 128], strides = [1, 1]} : vector<8x384xf32> to vector<8x128xf32>
    %124 = arith.addf %122, %123 : vector<8x128xf32>
    %125 = arith.negf %124 : vector<8x128xf32>
    %126 = math.exp %125 : vector<8x128xf32>
    %cst_34 = arith.constant 1.000000e+00 : f32
    %127 = vector.broadcast %cst_34 : f32 to vector<8x128xf32>
    %128 = arith.addf %127, %126 : vector<8x128xf32>
    %129 = arith.divf %127, %128 : vector<8x128xf32>
    %130 = vector.extract_strided_slice %112 {offsets = [0, 256], sizes = [8, 128], strides = [1, 1]} : vector<8x384xf32> to vector<8x128xf32>
    %131 = vector.extract_strided_slice %113 {offsets = [0, 256], sizes = [8, 128], strides = [1, 1]} : vector<8x384xf32> to vector<8x128xf32>
    %132 = arith.addf %131, %11 : vector<8x128xf32>
    %133 = arith.mulf %121, %132 : vector<8x128xf32>
    %134 = arith.addf %130, %133 : vector<8x128xf32>
    %135 = math.tanh %134 : vector<8x128xf32>
    %cst_35 = arith.constant 1.000000e+00 : f32
    %136 = vector.broadcast %cst_35 : f32 to vector<8x128xf32>
    %137 = arith.subf %136, %129 : vector<8x128xf32>
    %138 = arith.mulf %137, %135 : vector<8x128xf32>
    %139 = arith.mulf %129, %108 : vector<8x128xf32>
    %140 = arith.addf %138, %139 : vector<8x128xf32>
    %c4_i32 = arith.constant 4 : i32
    %c8_i32_36 = arith.constant 8 : i32
    %141 = arith.muli %c4_i32, %c8_i32_36 : i32
    %142 = tpu.assume_multiple %141, 8 : i32
    %143 = arith.index_cast %142 : i32 to index
    %c0_37 = arith.constant 0 : index
    %144 = vector.load %arg7[%143, %c0_37] : memref<64x384xf32, #tpu.memory_space<vmem>>, vector<8x384xf32>
    %cst_38 = arith.constant dense<0.000000e+00> : vector<8x384xf32>
    %145 = tpu.matmul %140, %8, %cst_38 {dimension_numbers = #tpu.dot_dimension_numbers<[1], [0], [0], [1], [0, 0, 1, 1], [], []>} : vector<8x128xf32>, vector<128x384xf32>, vector<8x384xf32> -> vector<8x384xf32>
    %146 = vector.extract_strided_slice %144 {offsets = [0, 0], sizes = [8, 128], strides = [1, 1]} : vector<8x384xf32> to vector<8x128xf32>
    %147 = vector.extract_strided_slice %145 {offsets = [0, 0], sizes = [8, 128], strides = [1, 1]} : vector<8x384xf32> to vector<8x128xf32>
    %148 = arith.addf %146, %147 : vector<8x128xf32>
    %149 = arith.negf %148 : vector<8x128xf32>
    %150 = math.exp %149 : vector<8x128xf32>
    %cst_39 = arith.constant 1.000000e+00 : f32
    %151 = vector.broadcast %cst_39 : f32 to vector<8x128xf32>
    %152 = arith.addf %151, %150 : vector<8x128xf32>
    %153 = arith.divf %151, %152 : vector<8x128xf32>
    %154 = vector.extract_strided_slice %144 {offsets = [0, 128], sizes = [8, 128], strides = [1, 1]} : vector<8x384xf32> to vector<8x128xf32>
    %155 = vector.extract_strided_slice %145 {offsets = [0, 128], sizes = [8, 128], strides = [1, 1]} : vector<8x384xf32> to vector<8x128xf32>
    %156 = arith.addf %154, %155 : vector<8x128xf32>
    %157 = arith.negf %156 : vector<8x128xf32>
    %158 = math.exp %157 : vector<8x128xf32>
    %cst_40 = arith.constant 1.000000e+00 : f32
    %159 = vector.broadcast %cst_40 : f32 to vector<8x128xf32>
    %160 = arith.addf %159, %158 : vector<8x128xf32>
    %161 = arith.divf %159, %160 : vector<8x128xf32>
    %162 = vector.extract_strided_slice %144 {offsets = [0, 256], sizes = [8, 128], strides = [1, 1]} : vector<8x384xf32> to vector<8x128xf32>
    %163 = vector.extract_strided_slice %145 {offsets = [0, 256], sizes = [8, 128], strides = [1, 1]} : vector<8x384xf32> to vector<8x128xf32>
    %164 = arith.addf %163, %11 : vector<8x128xf32>
    %165 = arith.mulf %153, %164 : vector<8x128xf32>
    %166 = arith.addf %162, %165 : vector<8x128xf32>
    %167 = math.tanh %166 : vector<8x128xf32>
    %cst_41 = arith.constant 1.000000e+00 : f32
    %168 = vector.broadcast %cst_41 : f32 to vector<8x128xf32>
    %169 = arith.subf %168, %161 : vector<8x128xf32>
    %170 = arith.mulf %169, %167 : vector<8x128xf32>
    %171 = arith.mulf %161, %140 : vector<8x128xf32>
    %172 = arith.addf %170, %171 : vector<8x128xf32>
    %c5_i32 = arith.constant 5 : i32
    %c8_i32_42 = arith.constant 8 : i32
    %173 = arith.muli %c5_i32, %c8_i32_42 : i32
    %174 = tpu.assume_multiple %173, 8 : i32
    %175 = arith.index_cast %174 : i32 to index
    %c0_43 = arith.constant 0 : index
    %176 = vector.load %arg7[%175, %c0_43] : memref<64x384xf32, #tpu.memory_space<vmem>>, vector<8x384xf32>
    %cst_44 = arith.constant dense<0.000000e+00> : vector<8x384xf32>
    %177 = tpu.matmul %172, %8, %cst_44 {dimension_numbers = #tpu.dot_dimension_numbers<[1], [0], [0], [1], [0, 0, 1, 1], [], []>} : vector<8x128xf32>, vector<128x384xf32>, vector<8x384xf32> -> vector<8x384xf32>
    %178 = vector.extract_strided_slice %176 {offsets = [0, 0], sizes = [8, 128], strides = [1, 1]} : vector<8x384xf32> to vector<8x128xf32>
    %179 = vector.extract_strided_slice %177 {offsets = [0, 0], sizes = [8, 128], strides = [1, 1]} : vector<8x384xf32> to vector<8x128xf32>
    %180 = arith.addf %178, %179 : vector<8x128xf32>
    %181 = arith.negf %180 : vector<8x128xf32>
    %182 = math.exp %181 : vector<8x128xf32>
    %cst_45 = arith.constant 1.000000e+00 : f32
    %183 = vector.broadcast %cst_45 : f32 to vector<8x128xf32>
    %184 = arith.addf %183, %182 : vector<8x128xf32>
    %185 = arith.divf %183, %184 : vector<8x128xf32>
    %186 = vector.extract_strided_slice %176 {offsets = [0, 128], sizes = [8, 128], strides = [1, 1]} : vector<8x384xf32> to vector<8x128xf32>
    %187 = vector.extract_strided_slice %177 {offsets = [0, 128], sizes = [8, 128], strides = [1, 1]} : vector<8x384xf32> to vector<8x128xf32>
    %188 = arith.addf %186, %187 : vector<8x128xf32>
    %189 = arith.negf %188 : vector<8x128xf32>
    %190 = math.exp %189 : vector<8x128xf32>
    %cst_46 = arith.constant 1.000000e+00 : f32
    %191 = vector.broadcast %cst_46 : f32 to vector<8x128xf32>
    %192 = arith.addf %191, %190 : vector<8x128xf32>
    %193 = arith.divf %191, %192 : vector<8x128xf32>
    %194 = vector.extract_strided_slice %176 {offsets = [0, 256], sizes = [8, 128], strides = [1, 1]} : vector<8x384xf32> to vector<8x128xf32>
    %195 = vector.extract_strided_slice %177 {offsets = [0, 256], sizes = [8, 128], strides = [1, 1]} : vector<8x384xf32> to vector<8x128xf32>
    %196 = arith.addf %195, %11 : vector<8x128xf32>
    %197 = arith.mulf %185, %196 : vector<8x128xf32>
    %198 = arith.addf %194, %197 : vector<8x128xf32>
    %199 = math.tanh %198 : vector<8x128xf32>
    %cst_47 = arith.constant 1.000000e+00 : f32
    %200 = vector.broadcast %cst_47 : f32 to vector<8x128xf32>
    %201 = arith.subf %200, %193 : vector<8x128xf32>
    %202 = arith.mulf %201, %199 : vector<8x128xf32>
    %203 = arith.mulf %193, %172 : vector<8x128xf32>
    %204 = arith.addf %202, %203 : vector<8x128xf32>
    %c6_i32 = arith.constant 6 : i32
    %c8_i32_48 = arith.constant 8 : i32
    %205 = arith.muli %c6_i32, %c8_i32_48 : i32
    %206 = tpu.assume_multiple %205, 8 : i32
    %207 = arith.index_cast %206 : i32 to index
    %c0_49 = arith.constant 0 : index
    %208 = vector.load %arg7[%207, %c0_49] : memref<64x384xf32, #tpu.memory_space<vmem>>, vector<8x384xf32>
    %cst_50 = arith.constant dense<0.000000e+00> : vector<8x384xf32>
    %209 = tpu.matmul %204, %8, %cst_50 {dimension_numbers = #tpu.dot_dimension_numbers<[1], [0], [0], [1], [0, 0, 1, 1], [], []>} : vector<8x128xf32>, vector<128x384xf32>, vector<8x384xf32> -> vector<8x384xf32>
    %210 = vector.extract_strided_slice %208 {offsets = [0, 0], sizes = [8, 128], strides = [1, 1]} : vector<8x384xf32> to vector<8x128xf32>
    %211 = vector.extract_strided_slice %209 {offsets = [0, 0], sizes = [8, 128], strides = [1, 1]} : vector<8x384xf32> to vector<8x128xf32>
    %212 = arith.addf %210, %211 : vector<8x128xf32>
    %213 = arith.negf %212 : vector<8x128xf32>
    %214 = math.exp %213 : vector<8x128xf32>
    %cst_51 = arith.constant 1.000000e+00 : f32
    %215 = vector.broadcast %cst_51 : f32 to vector<8x128xf32>
    %216 = arith.addf %215, %214 : vector<8x128xf32>
    %217 = arith.divf %215, %216 : vector<8x128xf32>
    %218 = vector.extract_strided_slice %208 {offsets = [0, 128], sizes = [8, 128], strides = [1, 1]} : vector<8x384xf32> to vector<8x128xf32>
    %219 = vector.extract_strided_slice %209 {offsets = [0, 128], sizes = [8, 128], strides = [1, 1]} : vector<8x384xf32> to vector<8x128xf32>
    %220 = arith.addf %218, %219 : vector<8x128xf32>
    %221 = arith.negf %220 : vector<8x128xf32>
    %222 = math.exp %221 : vector<8x128xf32>
    %cst_52 = arith.constant 1.000000e+00 : f32
    %223 = vector.broadcast %cst_52 : f32 to vector<8x128xf32>
    %224 = arith.addf %223, %222 : vector<8x128xf32>
    %225 = arith.divf %223, %224 : vector<8x128xf32>
    %226 = vector.extract_strided_slice %208 {offsets = [0, 256], sizes = [8, 128], strides = [1, 1]} : vector<8x384xf32> to vector<8x128xf32>
    %227 = vector.extract_strided_slice %209 {offsets = [0, 256], sizes = [8, 128], strides = [1, 1]} : vector<8x384xf32> to vector<8x128xf32>
    %228 = arith.addf %227, %11 : vector<8x128xf32>
    %229 = arith.mulf %217, %228 : vector<8x128xf32>
    %230 = arith.addf %226, %229 : vector<8x128xf32>
    %231 = math.tanh %230 : vector<8x128xf32>
    %cst_53 = arith.constant 1.000000e+00 : f32
    %232 = vector.broadcast %cst_53 : f32 to vector<8x128xf32>
    %233 = arith.subf %232, %225 : vector<8x128xf32>
    %234 = arith.mulf %233, %231 : vector<8x128xf32>
    %235 = arith.mulf %225, %204 : vector<8x128xf32>
    %236 = arith.addf %234, %235 : vector<8x128xf32>
    %c7_i32 = arith.constant 7 : i32
    %c8_i32_54 = arith.constant 8 : i32
    %237 = arith.muli %c7_i32, %c8_i32_54 : i32
    %238 = tpu.assume_multiple %237, 8 : i32
    %239 = arith.index_cast %238 : i32 to index
    %c0_55 = arith.constant 0 : index
    %240 = vector.load %arg7[%239, %c0_55] : memref<64x384xf32, #tpu.memory_space<vmem>>, vector<8x384xf32>
    %cst_56 = arith.constant dense<0.000000e+00> : vector<8x384xf32>
    %241 = tpu.matmul %236, %8, %cst_56 {dimension_numbers = #tpu.dot_dimension_numbers<[1], [0], [0], [1], [0, 0, 1, 1], [], []>} : vector<8x128xf32>, vector<128x384xf32>, vector<8x384xf32> -> vector<8x384xf32>
    %242 = vector.extract_strided_slice %240 {offsets = [0, 0], sizes = [8, 128], strides = [1, 1]} : vector<8x384xf32> to vector<8x128xf32>
    %243 = vector.extract_strided_slice %241 {offsets = [0, 0], sizes = [8, 128], strides = [1, 1]} : vector<8x384xf32> to vector<8x128xf32>
    %244 = arith.addf %242, %243 : vector<8x128xf32>
    %245 = arith.negf %244 : vector<8x128xf32>
    %246 = math.exp %245 : vector<8x128xf32>
    %cst_57 = arith.constant 1.000000e+00 : f32
    %247 = vector.broadcast %cst_57 : f32 to vector<8x128xf32>
    %248 = arith.addf %247, %246 : vector<8x128xf32>
    %249 = arith.divf %247, %248 : vector<8x128xf32>
    %250 = vector.extract_strided_slice %240 {offsets = [0, 128], sizes = [8, 128], strides = [1, 1]} : vector<8x384xf32> to vector<8x128xf32>
    %251 = vector.extract_strided_slice %241 {offsets = [0, 128], sizes = [8, 128], strides = [1, 1]} : vector<8x384xf32> to vector<8x128xf32>
    %252 = arith.addf %250, %251 : vector<8x128xf32>
    %253 = arith.negf %252 : vector<8x128xf32>
    %254 = math.exp %253 : vector<8x128xf32>
    %cst_58 = arith.constant 1.000000e+00 : f32
    %255 = vector.broadcast %cst_58 : f32 to vector<8x128xf32>
    %256 = arith.addf %255, %254 : vector<8x128xf32>
    %257 = arith.divf %255, %256 : vector<8x128xf32>
    %258 = vector.extract_strided_slice %240 {offsets = [0, 256], sizes = [8, 128], strides = [1, 1]} : vector<8x384xf32> to vector<8x128xf32>
    %259 = vector.extract_strided_slice %241 {offsets = [0, 256], sizes = [8, 128], strides = [1, 1]} : vector<8x384xf32> to vector<8x128xf32>
    %260 = arith.addf %259, %11 : vector<8x128xf32>
    %261 = arith.mulf %249, %260 : vector<8x128xf32>
    %262 = arith.addf %258, %261 : vector<8x128xf32>
    %263 = math.tanh %262 : vector<8x128xf32>
    %cst_59 = arith.constant 1.000000e+00 : f32
    %264 = vector.broadcast %cst_59 : f32 to vector<8x128xf32>
    %265 = arith.subf %264, %257 : vector<8x128xf32>
    %266 = arith.mulf %265, %263 : vector<8x128xf32>
    %267 = arith.mulf %257, %236 : vector<8x128xf32>
    %268 = arith.addf %266, %267 : vector<8x128xf32>
    %c8_i32_60 = arith.constant 8 : i32
    %c0_61 = arith.constant 0 : index
    %c0_62 = arith.constant 0 : index
    %c0_63 = arith.constant 0 : index
    %269 = vector.load %arg6[%c0_61, %c0_62, %c0_63] : memref<1x8x128xf32, #tpu.memory_space<vmem>>, vector<1x8x128xf32>
    %270 = vector.shape_cast %269 : vector<1x8x128xf32> to vector<8x128xf32>
    %271 = vector.shape_cast %268 : vector<8x128xf32> to vector<1x8x128xf32>
    tpu.vector_store %arg6[%c0_61, %c0_62, %c0_63], %271 {strides = array<i32>} : memref<1x8x128xf32, #tpu.memory_space<vmem>>, vector<1x8x128xf32>,
    return
  }
  func.func @transform_0(%arg0: i32) -> (i32, i32, i32) {
    %c0_i32 = arith.constant 0 : i32
    %c0_i32_0 = arith.constant 0 : i32
    %c0_i32_1 = arith.constant 0 : i32
    return %arg0, %c0_i32, %c0_i32_0 : i32, i32, i32
  }
  func.func @transform_1(%arg0: i32) -> (i32, i32) {
    %c0_i32 = arith.constant 0 : i32
    %c0_i32_0 = arith.constant 0 : i32
    %c0_i32_1 = arith.constant 0 : i32
    return %c0_i32, %c0_i32_0 : i32, i32
  }
  func.func @transform_2(%arg0: i32) -> (i32, i32) {
    %c0_i32 = arith.constant 0 : i32
    %c0_i32_0 = arith.constant 0 : i32
    %c0_i32_1 = arith.constant 0 : i32
    return %c0_i32, %c0_i32_0 : i32, i32
  }
  func.func @transform_3(%arg0: i32) -> (i32, i32) {
    %c0_i32 = arith.constant 0 : i32
    %c0_i32_0 = arith.constant 0 : i32
    %c0_i32_1 = arith.constant 0 : i32
    return %c0_i32, %c0_i32_0 : i32, i32
  }
  func.func @transform_4(%arg0: i32) -> (i32, i32) {
    %c0_i32 = arith.constant 0 : i32
    %c0_i32_0 = arith.constant 0 : i32
    %c0_i32_1 = arith.constant 0 : i32
    return %c0_i32, %c0_i32_0 : i32, i32
  }
  func.func @transform_5(%arg0: i32) -> (i32, i32, i32) {
    %c0_i32 = arith.constant 0 : i32
    %c0_i32_0 = arith.constant 0 : i32
    %c0_i32_1 = arith.constant 0 : i32
    return %arg0, %c0_i32, %c0_i32_0 : i32, i32, i32
  }
}

</mosaic_0001>

<llo_original>
// kernel: tpu_custom_call.1
$region0: #{tpu_custom_call.1}
  #allocation0 [shape = 'u32[]', space=smem, size = 0x4, offset = 0x4, fixed_abs, tag = 'smem constant byte address 0x4 - core index']
  #allocation1 [shape = 'u32[144,128]{1,0:T(1,128)}', space=vmem, size = 0x12000, scoped, tag = 'internal scratch']
  #allocation2 [shape = 'f32[64,384]{1,0:T(8,128)}', space=vmem, size = 0x18000, scoped, tag = 'scratch operand']
  %s0 = inlined_call_operand.hbm [shape: f32[1,64,128], index: 0, kind: input, shape index: {}]
  %s1 = inlined_call_operand.hbm [shape: f32[128,384], index: 1, kind: input, shape index: {}]
  %s2 = inlined_call_operand.hbm [shape: f32[128,384], index: 2, kind: input, shape index: {}]
  %s3 = inlined_call_operand.vmem [shape: f32[1,384], index: 3, kind: input, shape index: {}]
  %s4 = inlined_call_operand.vmem [shape: f32[1,128], index: 4, kind: input, shape index: {}]
  %s5 = inlined_call_operand.hbm [shape: f32[1,8,128], index: 5, kind: output, shape index: {}]
  %s6 = sld [smem:[#allocation0]]
  $region42: #{tpu_custom_call.1} parent=0
    _
  %s8 = ssub.s32 1, %s6
  %s9 = scalar_select 0, %s8, %s6
  $region1: #{tpu_custom_call.1} parent=0
    #allocation3 [shape = 'u8[32768]{0}', space=vmem, size = 0x8000, scoped, tag = 'input window, operand 0, single buffered']
    #allocation4 [shape = 's32[1]{0}', space=sflag, size = 0x4, scoped, tag = 'scoped memory for tpu_custom_call.1']
    #allocation5 [shape = 's32[1]{0}', space=sflag, size = 0x4, scoped, tag = 'scoped memory for tpu_custom_call.1']
    #allocation6 [shape = 'u8[196608]{0}', space=vmem, size = 0x30000, scoped, tag = 'input window, operand 1, single buffered']
    #allocation7 [shape = 's32[1]{0}', space=sflag, size = 0x4, scoped, tag = 'scoped memory for tpu_custom_call.1']
    #allocation8 [shape = 'u8[196608]{0}', space=vmem, size = 0x30000, scoped, tag = 'input window, operand 2, single buffered']
    #allocation9 [shape = 'u8[4096]{0}', space=vmem, size = 0x1000, scoped, tag = 'output window, operand 0, single buffered']
    %10 = vsyncpa [#allocation4], 0
    %11 = vsyncpa [#allocation7], 0
    %12 = vsyncpa [#allocation5], 0
    // Predicated region
    $region2: #{tpu_custom_call.1} parent=1 // pred_check
      _
    $region3: #{tpu_custom_call.1} parent=1 // pred_check_branch
      %14 = sbr.rel (0) target = $region5
    $region4: #{tpu_custom_call.1} parent=1 // pred_region
      %s16 = ssub.s32 1024, 1024
      %17 = vsyncadd [#allocation4], %s16
      %s18 = sshll.u32 [#allocation3], 4
      %s19 = int_to_ptr.vmem [resolvable:$true] %s18
      %24 = dma.hbm_to_vmem [thread:$0]  %s0, 1024, %s19, [#allocation4], 128, 128, 8
    $region5: #{tpu_custom_call.1} parent=1 // pred_fallthru
      _
    // Predicated region
    $region6: #{tpu_custom_call.1} parent=1 // pred_check
      _
    $region7: #{tpu_custom_call.1} parent=1 // pred_check_branch
      %26 = sbr.rel (0) target = $region9
    $region8: #{tpu_custom_call.1} parent=1 // pred_region
      %s28 = ssub.s32 6144, 6144
      %29 = vsyncadd [#allocation7], %s28
      %s30 = sshll.u32 [#allocation6], 4
      %s31 = int_to_ptr.vmem [resolvable:$true] %s30
      %36 = dma.hbm_to_vmem [thread:$0]  %s1, 6144, %s31, [#allocation7], 384, 384, 24
    $region9: #{tpu_custom_call.1} parent=1 // pred_fallthru
      _
    // Predicated region
    $region10: #{tpu_custom_call.1} parent=1 // pred_check
      _
    $region11: #{tpu_custom_call.1} parent=1 // pred_check_branch
      %38 = sbr.rel (0) target = $region13
    $region12: #{tpu_custom_call.1} parent=1 // pred_region
      %s40 = ssub.s32 6144, 6144
      %41 = vsyncadd [#allocation7], %s40
      %s42 = sshll.u32 [#allocation8], 4
      %s43 = int_to_ptr.vmem [resolvable:$true] %s42
      %48 = dma.hbm_to_vmem [thread:$0]  %s2, 6144, %s43, [#allocation7], 384, 384, 24
    $region13: #{tpu_custom_call.1} parent=1 // pred_fallthru
      _
    // Predicated region
    $region14: #{tpu_custom_call.1} parent=1 // pred_check
      _
    $region15: #{tpu_custom_call.1} parent=1 // pred_check_branch
      %50 = sbr.rel (0) target = $region17
    $region16: #{tpu_custom_call.1} parent=1 // pred_region
      _
    $region17: #{tpu_custom_call.1} parent=1 // pred_fallthru
      _
    // Predicated region
    $region18: #{tpu_custom_call.1} parent=1 // pred_check
      _
    $region19: #{tpu_custom_call.1} parent=1 // pred_check_branch
      %52 = sbr.rel (0) target = $region21
    $region20: #{tpu_custom_call.1} parent=1 // pred_region
      _
    $region21: #{tpu_custom_call.1} parent=1 // pred_fallthru
      _
    // Predicated region
    $region22: #{tpu_custom_call.1} parent=1 // pred_check
      _
    $region23: #{tpu_custom_call.1} parent=1 // pred_check_branch
      %54 = sbr.rel (0) target = $region25
    $region24: #{tpu_custom_call.1} parent=1 // pred_region
      %55 = dma.done [#allocation4], 1024
    $region25: #{tpu_custom_call.1} parent=1 // pred_fallthru
      _
    // Predicated region
    $region26: #{tpu_custom_call.1} parent=1 // pred_check
      _
    $region27: #{tpu_custom_call.1} parent=1 // pred_check_branch
      %57 = sbr.rel (0) target = $region29
    $region28: #{tpu_custom_call.1} parent=1 // pred_region
      %58 = dma.done [#allocation7], 6144
    $region29: #{tpu_custom_call.1} parent=1 // pred_fallthru
      _
    // Predicated region
    $region30: #{tpu_custom_call.1} parent=1 // pred_check
      _
    $region31: #{tpu_custom_call.1} parent=1 // pred_check_branch
      %60 = sbr.rel (0) target = $region33
    $region32: #{tpu_custom_call.1} parent=1 // pred_region
      %61 = dma.done [#allocation7], 6144
    $region33: #{tpu_custom_call.1} parent=1 // pred_fallthru
      _
    %v62 = vld [vmem:[#allocation3] sm:$0xff]
    %v63 = vld [vmem:[#allocation3 + $0x8] sm:$0xff]
    %v64 = vld [vmem:[#allocation3 + $0x10] sm:$0xff]
    %v65 = vld [vmem:[#allocation3 + $0x18] sm:$0xff]
    %v66 = vld [vmem:[#allocation3 + $0x20] sm:$0xff]
    %v67 = vld [vmem:[#allocation3 + $0x28] sm:$0xff]
    %v68 = vld [vmem:[#allocation3 + $0x30] sm:$0xff]
    %v69 = vld [vmem:[#allocation3 + $0x38] sm:$0xff]
    %v70 = vld [vmem:[#allocation6] sm:$0xff]
    %v71 = vld [vmem:[#allocation6 + $0x8] sm:$0xff]
    %v72 = vld [vmem:[#allocation6 + $0x10] sm:$0xff]
    %v73 = vld [vmem:[#allocation6 + $0x18] sm:$0xff]
    %v74 = vld [vmem:[#allocation6 + $0x20] sm:$0xff]
    %v75 = vld [vmem:[#allocation6 + $0x28] sm:$0xff]
    %v76 = vld [vmem:[#allocation6 + $0x30] sm:$0xff]
    %v77 = vld [vmem:[#allocation6 + $0x38] sm:$0xff]
    %v78 = vld [vmem:[#allocation6 + $0x40] sm:$0xff]
    %v79 = vld [vmem:[#allocation6 + $0x48] sm:$0xff]
    %v80 = vld [vmem:[#allocation6 + $0x50] sm:$0xff]
    %v81 = vld [vmem:[#allocation6 + $0x58] sm:$0xff]
    %v82 = vld [vmem:[#allocation6 + $0x60] sm:$0xff]
    %v83 = vld [vmem:[#allocation6 + $0x68] sm:$0xff]
    %v84 = vld [vmem:[#allocation6 + $0x70] sm:$0xff]
    %v85 = vld [vmem:[#allocation6 + $0x78] sm:$0xff]
    %v86 = vld [vmem:[#allocation6 + $0x80] sm:$0xff]
    %v87 = vld [vmem:[#allocation6 + $0x88] sm:$0xff]
    %v88 = vld [vmem:[#allocation6 + $0x90] sm:$0xff]
    %v89 = vld [vmem:[#allocation6 + $0x98] sm:$0xff]
    %v90 = vld [vmem:[#allocation6 + $0xa0] sm:$0xff]
    %v91 = vld [vmem:[#allocation6 + $0xa8] sm:$0xff]
    %v92 = vld [vmem:[#allocation6 + $0xb0] sm:$0xff]
    %v93 = vld [vmem:[#allocation6 + $0xb8] sm:$0xff]
    %v94 = vld [vmem:[#allocation6 + $0xc0] sm:$0xff]
    %v95 = vld [vmem:[#allocation6 + $0xc8] sm:$0xff]
    %v96 = vld [vmem:[#allocation6 + $0xd0] sm:$0xff]
    %v97 = vld [vmem:[#allocation6 + $0xd8] sm:$0xff]
    %v98 = vld [vmem:[#allocation6 + $0xe0] sm:$0xff]
    %v99 = vld [vmem:[#allocation6 + $0xe8] sm:$0xff]
    %v100 = vld [vmem:[#allocation6 + $0xf0] sm:$0xff]
    %v101 = vld [vmem:[#allocation6 + $0xf8] sm:$0xff]
    %v102 = vld [vmem:[#allocation6 + $0x100] sm:$0xff]
    %v103 = vld [vmem:[#allocation6 + $0x108] sm:$0xff]
    %v104 = vld [vmem:[#allocation6 + $0x110] sm:$0xff]
    %v105 = vld [vmem:[#allocation6 + $0x118] sm:$0xff]
    %v106 = vld [vmem:[#allocation6 + $0x120] sm:$0xff]
    %v107 = vld [vmem:[#allocation6 + $0x128] sm:$0xff]
    %v108 = vld [vmem:[#allocation6 + $0x130] sm:$0xff]
    %v109 = vld [vmem:[#allocation6 + $0x138] sm:$0xff]
    %v110 = vld [vmem:[#allocation6 + $0x140] sm:$0xff]
    %v111 = vld [vmem:[#allocation6 + $0x148] sm:$0xff]
    %v112 = vld [vmem:[#allocation6 + $0x150] sm:$0xff]
    %v113 = vld [vmem:[#allocation6 + $0x158] sm:$0xff]
    %v114 = vld [vmem:[#allocation6 + $0x160] sm:$0xff]
    %v115 = vld [vmem:[#allocation6 + $0x168] sm:$0xff]
    %v116 = vld [vmem:[#allocation6 + $0x170] sm:$0xff]
    %v117 = vld [vmem:[#allocation6 + $0x178] sm:$0xff]
    %v118 = vld [vmem:[%s3] sm:$0x7]
    %v120 = vlaneseq
    %v121 = vshrl.u32 %v120, 7
    %v122 = vsub.s32 0, %v121
    %v123 = vrot.slane %v118, %v122
    %v124 = vlaneseq
    %v125 = vshrl.u32 %v124, 7
    %v126 = vsub.s32 1, %v125
    %v127 = vrot.slane %v118, %v126
    %v128 = vlaneseq
    %v129 = vshrl.u32 %v128, 7
    %v130 = vsub.s32 2, %v129
    %v131 = vrot.slane %v118, %v130
    %135 = vmatprep.subr.mxu0 %v116
    %136 = vmatpush1.msra.mxu0 %v115
    %137 = vmatprep.subr.mxu0 %v113
    %138 = vmatpush1.msra.mxu0 %v112
    %139 = vmatprep.subr.mxu0 %v110
    %140 = vmatpush1.msra.mxu0 %v109
    %141 = vmatprep.subr.mxu0 %v107
    %142 = vmatpush1.msra.mxu0 %v106
    %143 = vmatprep.subr.mxu0 %v104
    %144 = vmatpush1.msra.mxu0 %v103
    %145 = vmatprep.subr.mxu0 %v101
    %146 = vmatpush1.msra.mxu0 %v100
    %147 = vmatprep.subr.mxu0 %v98
    %148 = vmatpush1.msra.mxu0 %v97
    %149 = vmatprep.subr.mxu0 %v95
    %150 = vmatpush1.msra.mxu0 %v94
    %151 = vmatprep.subr.mxu0 %v92
    %152 = vmatpush1.msra.mxu0 %v91
    %153 = vmatprep.subr.mxu0 %v89
    %154 = vmatpush1.msra.mxu0 %v88
    %155 = vmatprep.subr.mxu0 %v86
    %156 = vmatpush1.msra.mxu0 %v85
    %157 = vmatprep.subr.mxu0 %v83
    %158 = vmatpush1.msra.mxu0 %v82
    %159 = vmatprep.subr.mxu0 %v80
    %160 = vmatpush1.msra.mxu0 %v79
    %161 = vmatprep.subr.mxu0 %v77
    %162 = vmatpush1.msra.mxu0 %v76
    %163 = vmatprep.subr.mxu0 %v74
    %164 = vmatpush1.msra.mxu0 %v73
    %165 = vmatprep.subr.mxu0 %v71
    %166 = vmatpush1.msra.mxu0 %v70
    %167 = vmatprep.subr.mxu0 0.0
    %168 = vmatpush2.msra.mxu0 0.0
    %169 = vmatprep.subr.mxu0 0.0
    %170 = vmatpush2.msra.mxu0 0.0
    %171 = vmatprep.subr.mxu0 0.0
    %172 = vmatpush2.msra.mxu0 0.0
    %173 = vmatprep.subr.mxu0 0.0
    %174 = vmatpush2.msra.mxu0 0.0
    %175 = vmatprep.subr.mxu0 0.0
    %176 = vmatpush2.msra.mxu0 0.0
    %177 = vmatprep.subr.mxu0 0.0
    %178 = vmatpush2.msra.mxu0 0.0
    %179 = vmatprep.subr.mxu0 0.0
    %180 = vmatpush2.msra.mxu0 0.0
    %181 = vmatprep.subr.mxu0 0.0
    %182 = vmatpush2.msra.mxu0 0.0
    %183 = vmatprep.subr.mxu0 0.0
    %184 = vmatpush2.msra.mxu0 0.0
    %185 = vmatprep.subr.mxu0 0.0
    %186 = vmatpush2.msra.mxu0 0.0
    %187 = vmatprep.subr.mxu0 0.0
    %188 = vmatpush2.msra.mxu0 0.0
    %189 = vmatprep.subr.mxu0 0.0
    %190 = vmatpush2.msra.mxu0 0.0
    %191 = vmatprep.subr.mxu0 0.0
    %192 = vmatpush2.msra.mxu0 0.0
    %193 = vmatprep.subr.mxu0 0.0
    %194 = vmatpush2.msra.mxu0 0.0
    %195 = vmatprep.subr.mxu0 0.0
    %196 = vmatpush2.msra.mxu0 0.0
    %197 = vmatprep.subr.mxu0 0.0
    %198 = vmatpush2.msra.mxu0 0.0
    %199 = vmatprep.mubr.f32.mxu0 0.0
    %200 = vmatmul.mubr.f32.gmra.mxu0 %v62
    %v201 = vpop.f32.mrf.mxu0
    %v202 = vadd.f32 %v123, %v201
    %v203 = vpop.f32.mrf.mxu0
    %v204 = vadd.f32 %v127, %v203
    %205 = vmatprep.mubr.f32.mxu0 0.0
    %206 = vmatmul.mubr.f32.gmra.mxu0 %v63
    %v207 = vpop.f32.mrf.mxu0
    %v208 = vadd.f32 %v123, %v207
    %v209 = vpop.f32.mrf.mxu0
    %v210 = vadd.f32 %v127, %v209
    %211 = vmatprep.mubr.f32.mxu0 0.0
    %212 = vmatmul.mubr.f32.gmra.mxu0 %v64
    %v213 = vpop.f32.mrf.mxu0
    %v214 = vadd.f32 %v123, %v213
    %v215 = vpop.f32.mrf.mxu0
    %v216 = vadd.f32 %v127, %v215
    %217 = vmatprep.mubr.f32.mxu0 0.0
    %218 = vmatmul.mubr.f32.gmra.mxu0 %v65
    %v219 = vpop.f32.mrf.mxu0
    %v220 = vadd.f32 %v123, %v219
    %v221 = vpop.f32.mrf.mxu0
    %v222 = vadd.f32 %v127, %v221
    %223 = vmatprep.mubr.f32.mxu0 0.0
    %224 = vmatmul.mubr.f32.gmra.mxu0 %v66
    %v225 = vpop.f32.mrf.mxu0
    %v226 = vadd.f32 %v123, %v225
    %v227 = vpop.f32.mrf.mxu0
    %v228 = vadd.f32 %v127, %v227
    %229 = vmatprep.mubr.f32.mxu0 0.0
    %230 = vmatmul.mubr.f32.gmra.mxu0 %v67
    %v231 = vpop.f32.mrf.mxu0
    %v232 = vadd.f32 %v123, %v231
    %v233 = vpop.f32.mrf.mxu0
    %v234 = vadd.f32 %v127, %v233
    %235 = vmatprep.mubr.f32.mxu0 0.0
    %236 = vmatmul.mubr.f32.gmra.mxu0 %v68
    %v237 = vpop.f32.mrf.mxu0
    %v238 = vadd.f32 %v123, %v237
    %v239 = vpop.f32.mrf.mxu0
    %v240 = vadd.f32 %v127, %v239
    %241 = vmatprep.mubr.f32.mxu0 0.0
    %242 = vmatmul.mubr.f32.gmra.mxu0 %v69
    %v243 = vpop.f32.mrf.mxu0
    %v244 = vadd.f32 %v123, %v243
    %v245 = vpop.f32.mrf.mxu0
    %v246 = vadd.f32 %v127, %v245
    %247 = vdwg.mxu0
    %248 = vmatprep.subr.mxu0 0.0
    %249 = vmatpush1.msra.mxu0 %v117
    %250 = vmatprep.subr.mxu0 0.0
    %251 = vmatpush1.msra.mxu0 %v114
    %252 = vmatprep.subr.mxu0 0.0
    %253 = vmatpush1.msra.mxu0 %v111
    %254 = vmatprep.subr.mxu0 0.0
    %255 = vmatpush1.msra.mxu0 %v108
    %256 = vmatprep.subr.mxu0 0.0
    %257 = vmatpush1.msra.mxu0 %v105
    %258 = vmatprep.subr.mxu0 0.0
    %259 = vmatpush1.msra.mxu0 %v102
    %260 = vmatprep.subr.mxu0 0.0
    %261 = vmatpush1.msra.mxu0 %v99
    %262 = vmatprep.subr.mxu0 0.0
    %263 = vmatpush1.msra.mxu0 %v96
    %264 = vmatprep.subr.mxu0 0.0
    %265 = vmatpush1.msra.mxu0 %v93
    %266 = vmatprep.subr.mxu0 0.0
    %267 = vmatpush1.msra.mxu0 %v90
    %268 = vmatprep.subr.mxu0 0.0
    %269 = vmatpush1.msra.mxu0 %v87
    %270 = vmatprep.subr.mxu0 0.0
    %271 = vmatpush1.msra.mxu0 %v84
    %272 = vmatprep.subr.mxu0 0.0
    %273 = vmatpush1.msra.mxu0 %v81
    %274 = vmatprep.subr.mxu0 0.0
    %275 = vmatpush1.msra.mxu0 %v78
    %276 = vmatprep.subr.mxu0 0.0
    %277 = vmatpush1.msra.mxu0 %v75
    %278 = vmatprep.subr.mxu0 0.0
    %279 = vmatpush1.msra.mxu0 %v72
    %280 = vmatprep.subr.mxu0 0.0
    %281 = vmatpush2.msra.mxu0 0.0
    %282 = vmatprep.subr.mxu0 0.0
    %283 = vmatpush2.msra.mxu0 0.0
    %284 = vmatprep.subr.mxu0 0.0
    %285 = vmatpush2.msra.mxu0 0.0
    %286 = vmatprep.subr.mxu0 0.0
    %287 = vmatpush2.msra.mxu0 0.0
    %288 = vmatprep.subr.mxu0 0.0
    %289 = vmatpush2.msra.mxu0 0.0
    %290 = vmatprep.subr.mxu0 0.0
    %291 = vmatpush2.msra.mxu0 0.0
    %292 = vmatprep.subr.mxu0 0.0
    %293 = vmatpush2.msra.mxu0 0.0
    %294 = vmatprep.subr.mxu0 0.0
    %295 = vmatpush2.msra.mxu0 0.0
    %296 = vmatprep.subr.mxu0 0.0
    %297 = vmatpush2.msra.mxu0 0.0
    %298 = vmatprep.subr.mxu0 0.0
    %299 = vmatpush2.msra.mxu0 0.0
    %300 = vmatprep.subr.mxu0 0.0
    %301 = vmatpush2.msra.mxu0 0.0
    %302 = vmatprep.subr.mxu0 0.0
    %303 = vmatpush2.msra.mxu0 0.0
    %304 = vmatprep.subr.mxu0 0.0
    %305 = vmatpush2.msra.mxu0 0.0
    %306 = vmatprep.subr.mxu0 0.0
    %307 = vmatpush2.msra.mxu0 0.0
    %308 = vmatprep.subr.mxu0 0.0
    %309 = vmatpush2.msra.mxu0 0.0
    %310 = vmatprep.subr.mxu0 0.0
    %311 = vmatpush2.msra.mxu0 0.0
    %312 = vmatprep.mubr.f32.mxu0 0.0
    %313 = vmatmul.mubr.f32.gmra.mxu0 %v62
    %v314 = vpop.f32.mrf.mxu0
    %v315 = vadd.f32 %v131, %v314
    %v316 = vpop.f32.mrf.mxu0
    %317 = vmatprep.mubr.f32.mxu0 0.0
    %318 = vmatmul.mubr.f32.gmra.mxu0 %v63
    %v319 = vpop.f32.mrf.mxu0
    %v320 = vadd.f32 %v131, %v319
    %v321 = vpop.f32.mrf.mxu0
    %322 = vmatprep.mubr.f32.mxu0 0.0
    %323 = vmatmul.mubr.f32.gmra.mxu0 %v64
    %v324 = vpop.f32.mrf.mxu0
    %v325 = vadd.f32 %v131, %v324
    %v326 = vpop.f32.mrf.mxu0
    %327 = vmatprep.mubr.f32.mxu0 0.0
    %328 = vmatmul.mubr.f32.gmra.mxu0 %v65
    %v329 = vpop.f32.mrf.mxu0
    %v330 = vadd.f32 %v131, %v329
    %v331 = vpop.f32.mrf.mxu0
    %332 = vmatprep.mubr.f32.mxu0 0.0
    %333 = vmatmul.mubr.f32.gmra.mxu0 %v66
    %v334 = vpop.f32.mrf.mxu0
    %v335 = vadd.f32 %v131, %v334
    %v336 = vpop.f32.mrf.mxu0
    %337 = vmatprep.mubr.f32.mxu0 0.0
    %338 = vmatmul.mubr.f32.gmra.mxu0 %v67
    %v339 = vpop.f32.mrf.mxu0
    %v340 = vadd.f32 %v131, %v339
    %v341 = vpop.f32.mrf.mxu0
    %342 = vmatprep.mubr.f32.mxu0 0.0
    %343 = vmatmul.mubr.f32.gmra.mxu0 %v68
    %v344 = vpop.f32.mrf.mxu0
    %v345 = vadd.f32 %v131, %v344
    %v346 = vpop.f32.mrf.mxu0
    %347 = vmatprep.mubr.f32.mxu0 0.0
    %348 = vmatmul.mubr.f32.gmra.mxu0 %v69
    %v349 = vpop.f32.mrf.mxu0
    %v350 = vadd.f32 %v131, %v349
    %v351 = vpop.f32.mrf.mxu0
    %352 = vdwg.mxu0
    %353 = vst [vmem:[#allocation2] sm:$0xff] %v202
    %354 = vst [vmem:[#allocation2 + $0x8] sm:$0xff] %v204
    %355 = vst [vmem:[#allocation2 + $0x10] sm:$0xff] %v315
    %356 = vst [vmem:[#allocation2 + $0x18] sm:$0xff] %v208
    %357 = vst [vmem:[#allocation2 + $0x20] sm:$0xff] %v210
    %358 = vst [vmem:[#allocation2 + $0x28] sm:$0xff] %v320
    %359 = vst [vmem:[#allocation2 + $0x30] sm:$0xff] %v214
    %360 = vst [vmem:[#allocation2 + $0x38] sm:$0xff] %v216
    %361 = vst [vmem:[#allocation2 + $0x40] sm:$0xff] %v325
    %362 = vst [vmem:[#allocation2 + $0x48] sm:$0xff] %v220
    %363 = vst [vmem:[#allocation2 + $0x50] sm:$0xff] %v222
    %364 = vst [vmem:[#allocation2 + $0x58] sm:$0xff] %v330
    %365 = vst [vmem:[#allocation2 + $0x60] sm:$0xff] %v226
    %366 = vst [vmem:[#allocation2 + $0x68] sm:$0xff] %v228
    %367 = vst [vmem:[#allocation2 + $0x70] sm:$0xff] %v335
    %368 = vst [vmem:[#allocation2 + $0x78] sm:$0xff] %v232
    %369 = vst [vmem:[#allocation2 + $0x80] sm:$0xff] %v234
    %370 = vst [vmem:[#allocation2 + $0x88] sm:$0xff] %v340
    %371 = vst [vmem:[#allocation2 + $0x90] sm:$0xff] %v238
    %372 = vst [vmem:[#allocation2 + $0x98] sm:$0xff] %v240
    %373 = vst [vmem:[#allocation2 + $0xa0] sm:$0xff] %v345
    %374 = vst [vmem:[#allocation2 + $0xa8] sm:$0xff] %v244
    %375 = vst [vmem:[#allocation2 + $0xb0] sm:$0xff] %v246
    %376 = vst [vmem:[#allocation2 + $0xb8] sm:$0xff] %v350
    %v377 = vld [vmem:[#allocation8] sm:$0xff]
    %v378 = vld [vmem:[#allocation8 + $0x8] sm:$0xff]
    %v379 = vld [vmem:[#allocation8 + $0x10] sm:$0xff]
    %v380 = vld [vmem:[#allocation8 + $0x18] sm:$0xff]
    %v381 = vld [vmem:[#allocation8 + $0x20] sm:$0xff]
    %v382 = vld [vmem:[#allocation8 + $0x28] sm:$0xff]
    %v383 = vld [vmem:[#allocation8 + $0x30] sm:$0xff]
    %v384 = vld [vmem:[#allocation8 + $0x38] sm:$0xff]
    %v385 = vld [vmem:[#allocation8 + $0x40] sm:$0xff]
    %v386 = vld [vmem:[#allocation8 + $0x48] sm:$0xff]
    %v387 = vld [vmem:[#allocation8 + $0x50] sm:$0xff]
    %v388 = vld [vmem:[#allocation8 + $0x58] sm:$0xff]
    %v389 = vld [vmem:[#allocation8 + $0x60] sm:$0xff]
    %v390 = vld [vmem:[#allocation8 + $0x68] sm:$0xff]
    %v391 = vld [vmem:[#allocation8 + $0x70] sm:$0xff]
    %v392 = vld [vmem:[#allocation8 + $0x78] sm:$0xff]
    %v393 = vld [vmem:[#allocation8 + $0x80] sm:$0xff]
    %v394 = vld [vmem:[#allocation8 + $0x88] sm:$0xff]
    %v395 = vld [vmem:[#allocation8 + $0x90] sm:$0xff]
    %v396 = vld [vmem:[#allocation8 + $0x98] sm:$0xff]
    %v397 = vld [vmem:[#allocation8 + $0xa0] sm:$0xff]
    %v398 = vld [vmem:[#allocation8 + $0xa8] sm:$0xff]
    %v399 = vld [vmem:[#allocation8 + $0xb0] sm:$0xff]
    %v400 = vld [vmem:[#allocation8 + $0xb8] sm:$0xff]
    %v401 = vld [vmem:[#allocation8 + $0xc0] sm:$0xff]
    %v402 = vld [vmem:[#allocation8 + $0xc8] sm:$0xff]
    %v403 = vld [vmem:[#allocation8 + $0xd0] sm:$0xff]
    %v404 = vld [vmem:[#allocation8 + $0xd8] sm:$0xff]
    %v405 = vld [vmem:[#allocation8 + $0xe0] sm:$0xff]
    %v406 = vld [vmem:[#allocation8 + $0xe8] sm:$0xff]
    %v407 = vld [vmem:[#allocation8 + $0xf0] sm:$0xff]
    %v408 = vld [vmem:[#allocation8 + $0xf8] sm:$0xff]
    %v409 = vld [vmem:[#allocation8 + $0x100] sm:$0xff]
    %v410 = vld [vmem:[#allocation8 + $0x108] sm:$0xff]
    %v411 = vld [vmem:[#allocation8 + $0x110] sm:$0xff]
    %v412 = vld [vmem:[#allocation8 + $0x118] sm:$0xff]
    %v413 = vld [vmem:[#allocation8 + $0x120] sm:$0xff]
    %v414 = vld [vmem:[#allocation8 + $0x128] sm:$0xff]
    %v415 = vld [vmem:[#allocation8 + $0x130] sm:$0xff]
    %v416 = vld [vmem:[#allocation8 + $0x138] sm:$0xff]
    %v417 = vld [vmem:[#allocation8 + $0x140] sm:$0xff]
    %v418 = vld [vmem:[#allocation8 + $0x148] sm:$0xff]
    %v419 = vld [vmem:[#allocation8 + $0x150] sm:$0xff]
    %v420 = vld [vmem:[#allocation8 + $0x158] sm:$0xff]
    %v421 = vld [vmem:[#allocation8 + $0x160] sm:$0xff]
    %v422 = vld [vmem:[#allocation8 + $0x168] sm:$0xff]
    %v423 = vld [vmem:[#allocation8 + $0x170] sm:$0xff]
    %v424 = vld [vmem:[#allocation8 + $0x178] sm:$0xff]
    %v425 = vld [vmem:[%s4] sm:$0x1]
    %v427 = vlaneseq
    %v428 = vshrl.u32 %v427, 7
    %v429 = vsub.s32 0, %v428
    %v430 = vrot.slane %v425, %v429
    %s432 = smul.u32 0, 3
    %s433 = smul.addr %s432, 8
    %s434 = scalar_lea.vmem [#allocation2], %s433
    %v435 = vld [vmem:[%s434] sm:$0xff]
    %v436 = vld [vmem:[%s434 + $0x8] sm:$0xff]
    %v437 = vld [vmem:[%s434 + $0x10] sm:$0xff]
    %438 = vmatprep.subr.mxu0 %v423
    %439 = vmatpush1.msra.mxu0 %v422
    %440 = vmatprep.subr.mxu0 %v420
    %441 = vmatpush1.msra.mxu0 %v419
    %442 = vmatprep.subr.mxu0 %v417
    %443 = vmatpush1.msra.mxu0 %v416
    %444 = vmatprep.subr.mxu0 %v414
    %445 = vmatpush1.msra.mxu0 %v413
    %446 = vmatprep.subr.mxu0 %v411
    %447 = vmatpush1.msra.mxu0 %v410
    %448 = vmatprep.subr.mxu0 %v408
    %449 = vmatpush1.msra.mxu0 %v407
    %450 = vmatprep.subr.mxu0 %v405
    %451 = vmatpush1.msra.mxu0 %v404
    %452 = vmatprep.subr.mxu0 %v402
    %453 = vmatpush1.msra.mxu0 %v401
    %454 = vmatprep.subr.mxu0 %v399
    %455 = vmatpush1.msra.mxu0 %v398
    %456 = vmatprep.subr.mxu0 %v396
    %457 = vmatpush1.msra.mxu0 %v395
    %458 = vmatprep.subr.mxu0 %v393
    %459 = vmatpush1.msra.mxu0 %v392
    %460 = vmatprep.subr.mxu0 %v390
    %461 = vmatpush1.msra.mxu0 %v389
    %462 = vmatprep.subr.mxu0 %v387
    %463 = vmatpush1.msra.mxu0 %v386
    %464 = vmatprep.subr.mxu0 %v384
    %465 = vmatpush1.msra.mxu0 %v383
    %466 = vmatprep.subr.mxu0 %v381
    %467 = vmatpush1.msra.mxu0 %v380
    %468 = vmatprep.subr.mxu0 %v378
    %469 = vmatpush1.msra.mxu0 %v377
    %470 = vmatprep.subr.mxu0 0.0
    %471 = vmatpush2.msra.mxu0 0.0
    %472 = vmatprep.subr.mxu0 0.0
    %473 = vmatpush2.msra.mxu0 0.0
    %474 = vmatprep.subr.mxu0 0.0
    %475 = vmatpush2.msra.mxu0 0.0
    %476 = vmatprep.subr.mxu0 0.0
    %477 = vmatpush2.msra.mxu0 0.0
    %478 = vmatprep.subr.mxu0 0.0
    %479 = vmatpush2.msra.mxu0 0.0
    %480 = vmatprep.subr.mxu0 0.0
    %481 = vmatpush2.msra.mxu0 0.0
    %482 = vmatprep.subr.mxu0 0.0
    %483 = vmatpush2.msra.mxu0 0.0
    %484 = vmatprep.subr.mxu0 0.0
    %485 = vmatpush2.msra.mxu0 0.0
    %486 = vmatprep.subr.mxu0 0.0
    %487 = vmatpush2.msra.mxu0 0.0
    %488 = vmatprep.subr.mxu0 0.0
    %489 = vmatpush2.msra.mxu0 0.0
    %490 = vmatprep.subr.mxu0 0.0
    %491 = vmatpush2.msra.mxu0 0.0
    %492 = vmatprep.subr.mxu0 0.0
    %493 = vmatpush2.msra.mxu0 0.0
    %494 = vmatprep.subr.mxu0 0.0
    %495 = vmatpush2.msra.mxu0 0.0
    %496 = vmatprep.subr.mxu0 0.0
    %497 = vmatpush2.msra.mxu0 0.0
    %498 = vmatprep.subr.mxu0 0.0
    %499 = vmatpush2.msra.mxu0 0.0
    %500 = vmatprep.subr.mxu0 0.0
    %501 = vmatpush2.msra.mxu0 0.0
    %502 = vmatprep.mubr.f32.mxu0 0.0
    %503 = vmatmul.mubr.f32.gmra.mxu0 0.0
    %v504 = vpop.f32.mrf.mxu0
    %v505 = vadd.f32 0.0, %v504
    %v506 = vpop.f32.mrf.mxu0
    %v507 = vadd.f32 0.0, %v506
    %508 = vdwg.mxu0
    %509 = vmatprep.subr.mxu0 0.0
    %510 = vmatpush1.msra.mxu0 %v424
    %511 = vmatprep.subr.mxu0 0.0
    %512 = vmatpush1.msra.mxu0 %v421
    %513 = vmatprep.subr.mxu0 0.0
    %514 = vmatpush1.msra.mxu0 %v418
    %515 = vmatprep.subr.mxu0 0.0
    %516 = vmatpush1.msra.mxu0 %v415
    %517 = vmatprep.subr.mxu0 0.0
    %518 = vmatpush1.msra.mxu0 %v412
    %519 = vmatprep.subr.mxu0 0.0
    %520 = vmatpush1.msra.mxu0 %v409
    %521 = vmatprep.subr.mxu0 0.0
    %522 = vmatpush1.msra.mxu0 %v406
    %523 = vmatprep.subr.mxu0 0.0
    %524 = vmatpush1.msra.mxu0 %v403
    %525 = vmatprep.subr.mxu0 0.0
    %526 = vmatpush1.msra.mxu0 %v400
    %527 = vmatprep.subr.mxu0 0.0
    %528 = vmatpush1.msra.mxu0 %v397
    %529 = vmatprep.subr.mxu0 0.0
    %530 = vmatpush1.msra.mxu0 %v394
    %531 = vmatprep.subr.mxu0 0.0
    %532 = vmatpush1.msra.mxu0 %v391
    %533 = vmatprep.subr.mxu0 0.0
    %534 = vmatpush1.msra.mxu0 %v388
    %535 = vmatprep.subr.mxu0 0.0
    %536 = vmatpush1.msra.mxu0 %v385
    %537 = vmatprep.subr.mxu0 0.0
    %538 = vmatpush1.msra.mxu0 %v382
    %539 = vmatprep.subr.mxu0 0.0
    %540 = vmatpush1.msra.mxu0 %v379
    %541 = vmatprep.subr.mxu0 0.0
    %542 = vmatpush2.msra.mxu0 0.0
    %543 = vmatprep.subr.mxu0 0.0
    %544 = vmatpush2.msra.mxu0 0.0
    %545 = vmatprep.subr.mxu0 0.0
    %546 = vmatpush2.msra.mxu0 0.0
    %547 = vmatprep.subr.mxu0 0.0
    %548 = vmatpush2.msra.mxu0 0.0
    %549 = vmatprep.subr.mxu0 0.0
    %550 = vmatpush2.msra.mxu0 0.0
    %551 = vmatprep.subr.mxu0 0.0
    %552 = vmatpush2.msra.mxu0 0.0
    %553 = vmatprep.subr.mxu0 0.0
    %554 = vmatpush2.msra.mxu0 0.0
    %555 = vmatprep.subr.mxu0 0.0
    %556 = vmatpush2.msra.mxu0 0.0
    %557 = vmatprep.subr.mxu0 0.0
    %558 = vmatpush2.msra.mxu0 0.0
    %559 = vmatprep.subr.mxu0 0.0
    %560 = vmatpush2.msra.mxu0 0.0
    %561 = vmatprep.subr.mxu0 0.0
    %562 = vmatpush2.msra.mxu0 0.0
    %563 = vmatprep.subr.mxu0 0.0
    %564 = vmatpush2.msra.mxu0 0.0
    %565 = vmatprep.subr.mxu0 0.0
    %566 = vmatpush2.msra.mxu0 0.0
    %567 = vmatprep.subr.mxu0 0.0
    %568 = vmatpush2.msra.mxu0 0.0
    %569 = vmatprep.subr.mxu0 0.0
    %570 = vmatpush2.msra.mxu0 0.0
    %571 = vmatprep.subr.mxu0 0.0
    %572 = vmatpush2.msra.mxu0 0.0
    %573 = vmatprep.mubr.f32.mxu0 0.0
    %574 = vmatmul.mubr.f32.gmra.mxu0 0.0
    %v575 = vpop.f32.mrf.mxu0
    %v576 = vadd.f32 0.0, %v575
    %v577 = vpop.f32.mrf.mxu0
    %578 = vdwg.mxu0
    %v579 = vadd.f32 %v435, %v505
    %v580 = vxor.u32 %v579, 2147483648
    %v581 = vmul.f32 %v580, 1.442695
    %v582 = vpow.pop %v581
    %v583 = vadd.f32 %v582, 1.0
    %v584 = vrcp.pop %v583
    %v585 = vmul.f32 1.0, %v584
    %v586 = vadd.f32 %v436, %v507
    %v587 = vxor.u32 %v586, 2147483648
    %v588 = vmul.f32 %v587, 1.442695
    %v589 = vpow.pop %v588
    %v590 = vadd.f32 %v589, 1.0
    %v591 = vrcp.pop %v590
    %v592 = vmul.f32 1.0, %v591
    %v593 = vadd.f32 %v576, %v430
    %v594 = vmul.f32 %v585, %v593
    %v595 = vadd.f32 %v437, %v594
    %v596 = vtanh.pop %v595
    %v597 = vsub.f32 1.0, %v592
    %v598 = vmul.f32 %v597, %v596
    %v599 = vmul.f32 %v592, 0.0
    %v600 = vadd.f32 %v598, %v599
    %s601 = smul.u32 1, 3
    %s602 = smul.addr %s601, 8
    %s603 = scalar_lea.vmem [#allocation2], %s602
    %v604 = vld [vmem:[%s603] sm:$0xff]
    %v605 = vld [vmem:[%s603 + $0x8] sm:$0xff]
    %v606 = vld [vmem:[%s603 + $0x10] sm:$0xff]
    %607 = vmatprep.subr.mxu0 %v423
    %608 = vmatpush1.msra.mxu0 %v422
    %609 = vmatprep.subr.mxu0 %v420
    %610 = vmatpush1.msra.mxu0 %v419
    %611 = vmatprep.subr.mxu0 %v417
    %612 = vmatpush1.msra.mxu0 %v416
    %613 = vmatprep.subr.mxu0 %v414
    %614 = vmatpush1.msra.mxu0 %v413
    %615 = vmatprep.subr.mxu0 %v411
    %616 = vmatpush1.msra.mxu0 %v410
    %617 = vmatprep.subr.mxu0 %v408
    %618 = vmatpush1.msra.mxu0 %v407
    %619 = vmatprep.subr.mxu0 %v405
    %620 = vmatpush1.msra.mxu0 %v404
    %621 = vmatprep.subr.mxu0 %v402
    %622 = vmatpush1.msra.mxu0 %v401
    %623 = vmatprep.subr.mxu0 %v399
    %624 = vmatpush1.msra.mxu0 %v398
    %625 = vmatprep.subr.mxu0 %v396
    %626 = vmatpush1.msra.mxu0 %v395
    %627 = vmatprep.subr.mxu0 %v393
    %628 = vmatpush1.msra.mxu0 %v392
    %629 = vmatprep.subr.mxu0 %v390
    %630 = vmatpush1.msra.mxu0 %v389
    %631 = vmatprep.subr.mxu0 %v387
    %632 = vmatpush1.msra.mxu0 %v386
    %633 = vmatprep.subr.mxu0 %v384
    %634 = vmatpush1.msra.mxu0 %v383
    %635 = vmatprep.subr.mxu0 %v381
    %636 = vmatpush1.msra.mxu0 %v380
    %637 = vmatprep.subr.mxu0 %v378
    %638 = vmatpush1.msra.mxu0 %v377
    %639 = vmatprep.subr.mxu0 0.0
    %640 = vmatpush2.msra.mxu0 0.0
    %641 = vmatprep.subr.mxu0 0.0
    %642 = vmatpush2.msra.mxu0 0.0
    %643 = vmatprep.subr.mxu0 0.0
    %644 = vmatpush2.msra.mxu0 0.0
    %645 = vmatprep.subr.mxu0 0.0
    %646 = vmatpush2.msra.mxu0 0.0
    %647 = vmatprep.subr.mxu0 0.0
    %648 = vmatpush2.msra.mxu0 0.0
    %649 = vmatprep.subr.mxu0 0.0
    %650 = vmatpush2.msra.mxu0 0.0
    %651 = vmatprep.subr.mxu0 0.0
    %652 = vmatpush2.msra.mxu0 0.0
    %653 = vmatprep.subr.mxu0 0.0
    %654 = vmatpush2.msra.mxu0 0.0
    %655 = vmatprep.subr.mxu0 0.0
    %656 = vmatpush2.msra.mxu0 0.0
    %657 = vmatprep.subr.mxu0 0.0
    %658 = vmatpush2.msra.mxu0 0.0
    %659 = vmatprep.subr.mxu0 0.0
    %660 = vmatpush2.msra.mxu0 0.0
    %661 = vmatprep.subr.mxu0 0.0
    %662 = vmatpush2.msra.mxu0 0.0
    %663 = vmatprep.subr.mxu0 0.0
    %664 = vmatpush2.msra.mxu0 0.0
    %665 = vmatprep.subr.mxu0 0.0
    %666 = vmatpush2.msra.mxu0 0.0
    %667 = vmatprep.subr.mxu0 0.0
    %668 = vmatpush2.msra.mxu0 0.0
    %669 = vmatprep.subr.mxu0 0.0
    %670 = vmatpush2.msra.mxu0 0.0
    %671 = vmatprep.mubr.f32.mxu0 0.0
    %672 = vmatmul.mubr.f32.gmra.mxu0 %v600
    %v673 = vpop.f32.mrf.mxu0
    %v674 = vadd.f32 0.0, %v673
    %v675 = vpop.f32.mrf.mxu0
    %v676 = vadd.f32 0.0, %v675
    %677 = vdwg.mxu0
    %678 = vmatprep.subr.mxu0 0.0
    %679 = vmatpush1.msra.mxu0 %v424
    %680 = vmatprep.subr.mxu0 0.0
    %681 = vmatpush1.msra.mxu0 %v421
    %682 = vmatprep.subr.mxu0 0.0
    %683 = vmatpush1.msra.mxu0 %v418
    %684 = vmatprep.subr.mxu0 0.0
    %685 = vmatpush1.msra.mxu0 %v415
    %686 = vmatprep.subr.mxu0 0.0
    %687 = vmatpush1.msra.mxu0 %v412
    %688 = vmatprep.subr.mxu0 0.0
    %689 = vmatpush1.msra.mxu0 %v409
    %690 = vmatprep.subr.mxu0 0.0
    %691 = vmatpush1.msra.mxu0 %v406
    %692 = vmatprep.subr.mxu0 0.0
    %693 = vmatpush1.msra.mxu0 %v403
    %694 = vmatprep.subr.mxu0 0.0
    %695 = vmatpush1.msra.mxu0 %v400
    %696 = vmatprep.subr.mxu0 0.0
    %697 = vmatpush1.msra.mxu0 %v397
    %698 = vmatprep.subr.mxu0 0.0
    %699 = vmatpush1.msra.mxu0 %v394
    %700 = vmatprep.subr.mxu0 0.0
    %701 = vmatpush1.msra.mxu0 %v391
    %702 = vmatprep.subr.mxu0 0.0
    %703 = vmatpush1.msra.mxu0 %v388
    %704 = vmatprep.subr.mxu0 0.0
    %705 = vmatpush1.msra.mxu0 %v385
    %706 = vmatprep.subr.mxu0 0.0
    %707 = vmatpush1.msra.mxu0 %v382
    %708 = vmatprep.subr.mxu0 0.0
    %709 = vmatpush1.msra.mxu0 %v379
    %710 = vmatprep.subr.mxu0 0.0
    %711 = vmatpush2.msra.mxu0 0.0
    %712 = vmatprep.subr.mxu0 0.0
    %713 = vmatpush2.msra.mxu0 0.0
    %714 = vmatprep.subr.mxu0 0.0
    %715 = vmatpush2.msra.mxu0 0.0
    %716 = vmatprep.subr.mxu0 0.0
    %717 = vmatpush2.msra.mxu0 0.0
    %718 = vmatprep.subr.mxu0 0.0
    %719 = vmatpush2.msra.mxu0 0.0
    %720 = vmatprep.subr.mxu0 0.0
    %721 = vmatpush2.msra.mxu0 0.0
    %722 = vmatprep.subr.mxu0 0.0
    %723 = vmatpush2.msra.mxu0 0.0
    %724 = vmatprep.subr.mxu0 0.0
    %725 = vmatpush2.msra.mxu0 0.0
    %726 = vmatprep.subr.mxu0 0.0
    %727 = vmatpush2.msra.mxu0 0.0
    %728 = vmatprep.subr.mxu0 0.0
    %729 = vmatpush2.msra.mxu0 0.0
    %730 = vmatprep.subr.mxu0 0.0
    %731 = vmatpush2.msra.mxu0 0.0
    %732 = vmatprep.subr.mxu0 0.0
    %733 = vmatpush2.msra.mxu0 0.0
    %734 = vmatprep.subr.mxu0 0.0
    %735 = vmatpush2.msra.mxu0 0.0
    %736 = vmatprep.subr.mxu0 0.0
    %737 = vmatpush2.msra.mxu0 0.0
    %738 = vmatprep.subr.mxu0 0.0
    %739 = vmatpush2.msra.mxu0 0.0
    %740 = vmatprep.subr.mxu0 0.0
    %741 = vmatpush2.msra.mxu0 0.0
    %742 = vmatprep.mubr.f32.mxu0 0.0
    %743 = vmatmul.mubr.f32.gmra.mxu0 %v600
    %v744 = vpop.f32.mrf.mxu0
    %v745 = vadd.f32 0.0, %v744
    %v746 = vpop.f32.mrf.mxu0
    %747 = vdwg.mxu0
    %v748 = vadd.f32 %v604, %v674
    %v749 = vxor.u32 %v748, 2147483648
    %v750 = vmul.f32 %v749, 1.442695
    %v751 = vpow.pop %v750
    %v752 = vadd.f32 %v751, 1.0
    %v753 = vrcp.pop %v752
    %v754 = vmul.f32 1.0, %v753
    %v755 = vadd.f32 %v605, %v676
    %v756 = vxor.u32 %v755, 2147483648
    %v757 = vmul.f32 %v756, 1.442695
    %v758 = vpow.pop %v757
    %v759 = vadd.f32 %v758, 1.0
    %v760 = vrcp.pop %v759
    %v761 = vmul.f32 1.0, %v760
    %v762 = vadd.f32 %v745, %v430
    %v763 = vmul.f32 %v754, %v762
    %v764 = vadd.f32 %v606, %v763
    %v765 = vtanh.pop %v764
    %v766 = vsub.f32 1.0, %v761
    %v767 = vmul.f32 %v766, %v765
    %v768 = vmul.f32 %v761, %v600
    %v769 = vadd.f32 %v767, %v768
    %s770 = smul.u32 2, 3
    %s771 = smul.addr %s770, 8
    %s772 = scalar_lea.vmem [#allocation2], %s771
    %v773 = vld [vmem:[%s772] sm:$0xff]
    %v774 = vld [vmem:[%s772 + $0x8] sm:$0xff]
    %v775 = vld [vmem:[%s772 + $0x10] sm:$0xff]
    %776 = vmatprep.subr.mxu0 %v423
    %777 = vmatpush1.msra.mxu0 %v422
    %778 = vmatprep.subr.mxu0 %v420
    %779 = vmatpush1.msra.mxu0 %v419
    %780 = vmatprep.subr.mxu0 %v417
    %781 = vmatpush1.msra.mxu0 %v416
    %782 = vmatprep.subr.mxu0 %v414
    %783 = vmatpush1.msra.mxu0 %v413
    %784 = vmatprep.subr.mxu0 %v411
    %785 = vmatpush1.msra.mxu0 %v410
    %786 = vmatprep.subr.mxu0 %v408
    %787 = vmatpush1.msra.mxu0 %v407
    %788 = vmatprep.subr.mxu0 %v405
    %789 = vmatpush1.msra.mxu0 %v404
    %790 = vmatprep.subr.mxu0 %v402
    %791 = vmatpush1.msra.mxu0 %v401
    %792 = vmatprep.subr.mxu0 %v399
    %793 = vmatpush1.msra.mxu0 %v398
    %794 = vmatprep.subr.mxu0 %v396
    %795 = vmatpush1.msra.mxu0 %v395
    %796 = vmatprep.subr.mxu0 %v393
    %797 = vmatpush1.msra.mxu0 %v392
    %798 = vmatprep.subr.mxu0 %v390
    %799 = vmatpush1.msra.mxu0 %v389
    %800 = vmatprep.subr.mxu0 %v387
    %801 = vmatpush1.msra.mxu0 %v386
    %802 = vmatprep.subr.mxu0 %v384
    %803 = vmatpush1.msra.mxu0 %v383
    %804 = vmatprep.subr.mxu0 %v381
    %805 = vmatpush1.msra.mxu0 %v380
    %806 = vmatprep.subr.mxu0 %v378
    %807 = vmatpush1.msra.mxu0 %v377
    %808 = vmatprep.subr.mxu0 0.0
    %809 = vmatpush2.msra.mxu0 0.0
    %810 = vmatprep.subr.mxu0 0.0
    %811 = vmatpush2.msra.mxu0 0.0
    %812 = vmatprep.subr.mxu0 0.0
    %813 = vmatpush2.msra.mxu0 0.0
    %814 = vmatprep.subr.mxu0 0.0
    %815 = vmatpush2.msra.mxu0 0.0
    %816 = vmatprep.subr.mxu0 0.0
    %817 = vmatpush2.msra.mxu0 0.0
    %818 = vmatprep.subr.mxu0 0.0
    %819 = vmatpush2.msra.mxu0 0.0
    %820 = vmatprep.subr.mxu0 0.0
    %821 = vmatpush2.msra.mxu0 0.0
    %822 = vmatprep.subr.mxu0 0.0
    %823 = vmatpush2.msra.mxu0 0.0
    %824 = vmatprep.subr.mxu0 0.0
    %825 = vmatpush2.msra.mxu0 0.0
    %826 = vmatprep.subr.mxu0 0.0
    %827 = vmatpush2.msra.mxu0 0.0
    %828 = vmatprep.subr.mxu0 0.0
    %829 = vmatpush2.msra.mxu0 0.0
    %830 = vmatprep.subr.mxu0 0.0
    %831 = vmatpush2.msra.mxu0 0.0
    %832 = vmatprep.subr.mxu0 0.0
    %833 = vmatpush2.msra.mxu0 0.0
    %834 = vmatprep.subr.mxu0 0.0
    %835 = vmatpush2.msra.mxu0 0.0
    %836 = vmatprep.subr.mxu0 0.0
    %837 = vmatpush2.msra.mxu0 0.0
    %838 = vmatprep.subr.mxu0 0.0
    %839 = vmatpush2.msra.mxu0 0.0
    %840 = vmatprep.mubr.f32.mxu0 0.0
    %841 = vmatmul.mubr.f32.gmra.mxu0 %v769
    %v842 = vpop.f32.mrf.mxu0
    %v843 = vadd.f32 0.0, %v842
    %v844 = vpop.f32.mrf.mxu0
    %v845 = vadd.f32 0.0, %v844
    %846 = vdwg.mxu0
    %847 = vmatprep.subr.mxu0 0.0
    %848 = vmatpush1.msra.mxu0 %v424
    %849 = vmatprep.subr.mxu0 0.0
    %850 = vmatpush1.msra.mxu0 %v421
    %851 = vmatprep.subr.mxu0 0.0
    %852 = vmatpush1.msra.mxu0 %v418
    %853 = vmatprep.subr.mxu0 0.0
    %854 = vmatpush1.msra.mxu0 %v415
    %855 = vmatprep.subr.mxu0 0.0
    %856 = vmatpush1.msra.mxu0 %v412
    %857 = vmatprep.subr.mxu0 0.0
    %858 = vmatpush1.msra.mxu0 %v409
    %859 = vmatprep.subr.mxu0 0.0
    %860 = vmatpush1.msra.mxu0 %v406
    %861 = vmatprep.subr.mxu0 0.0
    %862 = vmatpush1.msra.mxu0 %v403
    %863 = vmatprep.subr.mxu0 0.0
    %864 = vmatpush1.msra.mxu0 %v400
    %865 = vmatprep.subr.mxu0 0.0
    %866 = vmatpush1.msra.mxu0 %v397
    %867 = vmatprep.subr.mxu0 0.0
    %868 = vmatpush1.msra.mxu0 %v394
    %869 = vmatprep.subr.mxu0 0.0
    %870 = vmatpush1.msra.mxu0 %v391
    %871 = vmatprep.subr.mxu0 0.0
    %872 = vmatpush1.msra.mxu0 %v388
    %873 = vmatprep.subr.mxu0 0.0
    %874 = vmatpush1.msra.mxu0 %v385
    %875 = vmatprep.subr.mxu0 0.0
    %876 = vmatpush1.msra.mxu0 %v382
    %877 = vmatprep.subr.mxu0 0.0
    %878 = vmatpush1.msra.mxu0 %v379
    %879 = vmatprep.subr.mxu0 0.0
    %880 = vmatpush2.msra.mxu0 0.0
    %881 = vmatprep.subr.mxu0 0.0
    %882 = vmatpush2.msra.mxu0 0.0
    %883 = vmatprep.subr.mxu0 0.0
    %884 = vmatpush2.msra.mxu0 0.0
    %885 = vmatprep.subr.mxu0 0.0
    %886 = vmatpush2.msra.mxu0 0.0
    %887 = vmatprep.subr.mxu0 0.0
    %888 = vmatpush2.msra.mxu0 0.0
    %889 = vmatprep.subr.mxu0 0.0
    %890 = vmatpush2.msra.mxu0 0.0
    %891 = vmatprep.subr.mxu0 0.0
    %892 = vmatpush2.msra.mxu0 0.0
    %893 = vmatprep.subr.mxu0 0.0
    %894 = vmatpush2.msra.mxu0 0.0
    %895 = vmatprep.subr.mxu0 0.0
    %896 = vmatpush2.msra.mxu0 0.0
    %897 = vmatprep.subr.mxu0 0.0
    %898 = vmatpush2.msra.mxu0 0.0
    %899 = vmatprep.subr.mxu0 0.0
    %900 = vmatpush2.msra.mxu0 0.0
    %901 = vmatprep.subr.mxu0 0.0
    %902 = vmatpush2.msra.mxu0 0.0
    %903 = vmatprep.subr.mxu0 0.0
    %904 = vmatpush2.msra.mxu0 0.0
    %905 = vmatprep.subr.mxu0 0.0
    %906 = vmatpush2.msra.mxu0 0.0
    %907 = vmatprep.subr.mxu0 0.0
    %908 = vmatpush2.msra.mxu0 0.0
    %909 = vmatprep.subr.mxu0 0.0
    %910 = vmatpush2.msra.mxu0 0.0
    %911 = vmatprep.mubr.f32.mxu0 0.0
    %912 = vmatmul.mubr.f32.gmra.mxu0 %v769
    %v913 = vpop.f32.mrf.mxu0
    %v914 = vadd.f32 0.0, %v913
    %v915 = vpop.f32.mrf.mxu0
    %916 = vdwg.mxu0
    %v917 = vadd.f32 %v773, %v843
    %v918 = vxor.u32 %v917, 2147483648
    %v919 = vmul.f32 %v918, 1.442695
    %v920 = vpow.pop %v919
    %v921 = vadd.f32 %v920, 1.0
    %v922 = vrcp.pop %v921
    %v923 = vmul.f32 1.0, %v922
    %v924 = vadd.f32 %v774, %v845
    %v925 = vxor.u32 %v924, 2147483648
    %v926 = vmul.f32 %v925, 1.442695
    %v927 = vpow.pop %v926
    %v928 = vadd.f32 %v927, 1.0
    %v929 = vrcp.pop %v928
    %v930 = vmul.f32 1.0, %v929
    %v931 = vadd.f32 %v914, %v430
    %v932 = vmul.f32 %v923, %v931
    %v933 = vadd.f32 %v775, %v932
    %v934 = vtanh.pop %v933
    %v935 = vsub.f32 1.0, %v930
    %v936 = vmul.f32 %v935, %v934
    %v937 = vmul.f32 %v930, %v769
    %v938 = vadd.f32 %v936, %v937
    %s939 = smul.u32 3, 3
    %s940 = smul.addr %s939, 8
    %s941 = scalar_lea.vmem [#allocation2], %s940
    %v942 = vld [vmem:[%s941] sm:$0xff]
    %v943 = vld [vmem:[%s941 + $0x8] sm:$0xff]
    %v944 = vld [vmem:[%s941 + $0x10] sm:$0xff]
    %945 = vmatprep.subr.mxu0 %v423
    %946 = vmatpush1.msra.mxu0 %v422
    %947 = vmatprep.subr.mxu0 %v420
    %948 = vmatpush1.msra.mxu0 %v419
    %949 = vmatprep.subr.mxu0 %v417
    %950 = vmatpush1.msra.mxu0 %v416
    %951 = vmatprep.subr.mxu0 %v414
    %952 = vmatpush1.msra.mxu0 %v413
    %953 = vmatprep.subr.mxu0 %v411
    %954 = vmatpush1.msra.mxu0 %v410
    %955 = vmatprep.subr.mxu0 %v408
    %956 = vmatpush1.msra.mxu0 %v407
    %957 = vmatprep.subr.mxu0 %v405
    %958 = vmatpush1.msra.mxu0 %v404
    %959 = vmatprep.subr.mxu0 %v402
    %960 = vmatpush1.msra.mxu0 %v401
    %961 = vmatprep.subr.mxu0 %v399
    %962 = vmatpush1.msra.mxu0 %v398
    %963 = vmatprep.subr.mxu0 %v396
    %964 = vmatpush1.msra.mxu0 %v395
    %965 = vmatprep.subr.mxu0 %v393
    %966 = vmatpush1.msra.mxu0 %v392
    %967 = vmatprep.subr.mxu0 %v390
    %968 = vmatpush1.msra.mxu0 %v389
    %969 = vmatprep.subr.mxu0 %v387
    %970 = vmatpush1.msra.mxu0 %v386
    %971 = vmatprep.subr.mxu0 %v384
    %972 = vmatpush1.msra.mxu0 %v383
    %973 = vmatprep.subr.mxu0 %v381
    %974 = vmatpush1.msra.mxu0 %v380
    %975 = vmatprep.subr.mxu0 %v378
    %976 = vmatpush1.msra.mxu0 %v377
    %977 = vmatprep.subr.mxu0 0.0
    %978 = vmatpush2.msra.mxu0 0.0
    %979 = vmatprep.subr.mxu0 0.0
    %980 = vmatpush2.msra.mxu0 0.0
    %981 = vmatprep.subr.mxu0 0.0
    %982 = vmatpush2.msra.mxu0 0.0
    %983 = vmatprep.subr.mxu0 0.0
    %984 = vmatpush2.msra.mxu0 0.0
    %985 = vmatprep.subr.mxu0 0.0
    %986 = vmatpush2.msra.mxu0 0.0
    %987 = vmatprep.subr.mxu0 0.0
    %988 = vmatpush2.msra.mxu0 0.0
    %989 = vmatprep.subr.mxu0 0.0
    %990 = vmatpush2.msra.mxu0 0.0
    %991 = vmatprep.subr.mxu0 0.0
    %992 = vmatpush2.msra.mxu0 0.0
    %993 = vmatprep.subr.mxu0 0.0
    %994 = vmatpush2.msra.mxu0 0.0
    %995 = vmatprep.subr.mxu0 0.0
    %996 = vmatpush2.msra.mxu0 0.0
    %997 = vmatprep.subr.mxu0 0.0
    %998 = vmatpush2.msra.mxu0 0.0
    %999 = vmatprep.subr.mxu0 0.0
    %1000 = vmatpush2.msra.mxu0 0.0
    %1001 = vmatprep.subr.mxu0 0.0
    %1002 = vmatpush2.msra.mxu0 0.0
    %1003 = vmatprep.subr.mxu0 0.0
    %1004 = vmatpush2.msra.mxu0 0.0
    %1005 = vmatprep.subr.mxu0 0.0
    %1006 = vmatpush2.msra.mxu0 0.0
    %1007 = vmatprep.subr.mxu0 0.0
    %1008 = vmatpush2.msra.mxu0 0.0
    %1009 = vmatprep.mubr.f32.mxu0 0.0
    %1010 = vmatmul.mubr.f32.gmra.mxu0 %v938
    %v1011 = vpop.f32.mrf.mxu0
    %v1012 = vadd.f32 0.0, %v1011
    %v1013 = vpop.f32.mrf.mxu0
    %v1014 = vadd.f32 0.0, %v1013
    %1015 = vdwg.mxu0
    %1016 = vmatprep.subr.mxu0 0.0
    %1017 = vmatpush1.msra.mxu0 %v424
    %1018 = vmatprep.subr.mxu0 0.0
    %1019 = vmatpush1.msra.mxu0 %v421
    %1020 = vmatprep.subr.mxu0 0.0
    %1021 = vmatpush1.msra.mxu0 %v418
    %1022 = vmatprep.subr.mxu0 0.0
    %1023 = vmatpush1.msra.mxu0 %v415
    %1024 = vmatprep.subr.mxu0 0.0
    %1025 = vmatpush1.msra.mxu0 %v412
    %1026 = vmatprep.subr.mxu0 0.0
    %1027 = vmatpush1.msra.mxu0 %v409
    %1028 = vmatprep.subr.mxu0 0.0
    %1029 = vmatpush1.msra.mxu0 %v406
    %1030 = vmatprep.subr.mxu0 0.0
    %1031 = vmatpush1.msra.mxu0 %v403
    %1032 = vmatprep.subr.mxu0 0.0
    %1033 = vmatpush1.msra.mxu0 %v400
    %1034 = vmatprep.subr.mxu0 0.0
    %1035 = vmatpush1.msra.mxu0 %v397
    %1036 = vmatprep.subr.mxu0 0.0
    %1037 = vmatpush1.msra.mxu0 %v394
    %1038 = vmatprep.subr.mxu0 0.0
    %1039 = vmatpush1.msra.mxu0 %v391
    %1040 = vmatprep.subr.mxu0 0.0
    %1041 = vmatpush1.msra.mxu0 %v388
    %1042 = vmatprep.subr.mxu0 0.0
    %1043 = vmatpush1.msra.mxu0 %v385
    %1044 = vmatprep.subr.mxu0 0.0
    %1045 = vmatpush1.msra.mxu0 %v382
    %1046 = vmatprep.subr.mxu0 0.0
    %1047 = vmatpush1.msra.mxu0 %v379
    %1048 = vmatprep.subr.mxu0 0.0
    %1049 = vmatpush2.msra.mxu0 0.0
    %1050 = vmatprep.subr.mxu0 0.0
    %1051 = vmatpush2.msra.mxu0 0.0
    %1052 = vmatprep.subr.mxu0 0.0
    %1053 = vmatpush2.msra.mxu0 0.0
    %1054 = vmatprep.subr.mxu0 0.0
    %1055 = vmatpush2.msra.mxu0 0.0
    %1056 = vmatprep.subr.mxu0 0.0
    %1057 = vmatpush2.msra.mxu0 0.0
    %1058 = vmatprep.subr.mxu0 0.0
    %1059 = vmatpush2.msra.mxu0 0.0
    %1060 = vmatprep.subr.mxu0 0.0
    %1061 = vmatpush2.msra.mxu0 0.0
    %1062 = vmatprep.subr.mxu0 0.0
    %1063 = vmatpush2.msra.mxu0 0.0
    %1064 = vmatprep.subr.mxu0 0.0
    %1065 = vmatpush2.msra.mxu0 0.0
    %1066 = vmatprep.subr.mxu0 0.0
    %1067 = vmatpush2.msra.mxu0 0.0
    %1068 = vmatprep.subr.mxu0 0.0
    %1069 = vmatpush2.msra.mxu0 0.0
    %1070 = vmatprep.subr.mxu0 0.0
    %1071 = vmatpush2.msra.mxu0 0.0
    %1072 = vmatprep.subr.mxu0 0.0
    %1073 = vmatpush2.msra.mxu0 0.0
    %1074 = vmatprep.subr.mxu0 0.0
    %1075 = vmatpush2.msra.mxu0 0.0
    %1076 = vmatprep.subr.mxu0 0.0
    %1077 = vmatpush2.msra.mxu0 0.0
    %1078 = vmatprep.subr.mxu0 0.0
    %1079 = vmatpush2.msra.mxu0 0.0
    %1080 = vmatprep.mubr.f32.mxu0 0.0
    %1081 = vmatmul.mubr.f32.gmra.mxu0 %v938
    %v1082 = vpop.f32.mrf.mxu0
    %v1083 = vadd.f32 0.0, %v1082
    %v1084 = vpop.f32.mrf.mxu0
    %1085 = vdwg.mxu0
    %v1086 = vadd.f32 %v942, %v1012
    %v1087 = vxor.u32 %v1086, 2147483648
    %v1088 = vmul.f32 %v1087, 1.442695
    %v1089 = vpow.pop %v1088
    %v1090 = vadd.f32 %v1089, 1.0
    %v1091 = vrcp.pop %v1090
    %v1092 = vmul.f32 1.0, %v1091
    %v1093 = vadd.f32 %v943, %v1014
    %v1094 = vxor.u32 %v1093, 2147483648
    %v1095 = vmul.f32 %v1094, 1.442695
    %v1096 = vpow.pop %v1095
    %v1097 = vadd.f32 %v1096, 1.0
    %v1098 = vrcp.pop %v1097
    %v1099 = vmul.f32 1.0, %v1098
    %v1100 = vadd.f32 %v1083, %v430
    %v1101 = vmul.f32 %v1092, %v1100
    %v1102 = vadd.f32 %v944, %v1101
    %v1103 = vtanh.pop %v1102
    %v1104 = vsub.f32 1.0, %v1099
    %v1105 = vmul.f32 %v1104, %v1103
    %v1106 = vmul.f32 %v1099, %v938
    %v1107 = vadd.f32 %v1105, %v1106
    %s1108 = smul.u32 4, 3
    %s1109 = smul.addr %s1108, 8
    %s1110 = scalar_lea.vmem [#allocation2], %s1109
    %v1111 = vld [vmem:[%s1110] sm:$0xff]
    %v1112 = vld [vmem:[%s1110 + $0x8] sm:$0xff]
    %v1113 = vld [vmem:[%s1110 + $0x10] sm:$0xff]
    %1114 = vmatprep.subr.mxu0 %v423
    %1115 = vmatpush1.msra.mxu0 %v422
    %1116 = vmatprep.subr.mxu0 %v420
    %1117 = vmatpush1.msra.mxu0 %v419
    %1118 = vmatprep.subr.mxu0 %v417
    %1119 = vmatpush1.msra.mxu0 %v416
    %1120 = vmatprep.subr.mxu0 %v414
    %1121 = vmatpush1.msra.mxu0 %v413
    %1122 = vmatprep.subr.mxu0 %v411
    %1123 = vmatpush1.msra.mxu0 %v410
    %1124 = vmatprep.subr.mxu0 %v408
    %1125 = vmatpush1.msra.mxu0 %v407
    %1126 = vmatprep.subr.mxu0 %v405
    %1127 = vmatpush1.msra.mxu0 %v404
    %1128 = vmatprep.subr.mxu0 %v402
    %1129 = vmatpush1.msra.mxu0 %v401
    %1130 = vmatprep.subr.mxu0 %v399
    %1131 = vmatpush1.msra.mxu0 %v398
    %1132 = vmatprep.subr.mxu0 %v396
    %1133 = vmatpush1.msra.mxu0 %v395
    %1134 = vmatprep.subr.mxu0 %v393
    %1135 = vmatpush1.msra.mxu0 %v392
    %1136 = vmatprep.subr.mxu0 %v390
    %1137 = vmatpush1.msra.mxu0 %v389
    %1138 = vmatprep.subr.mxu0 %v387
    %1139 = vmatpush1.msra.mxu0 %v386
    %1140 = vmatprep.subr.mxu0 %v384
    %1141 = vmatpush1.msra.mxu0 %v383
    %1142 = vmatprep.subr.mxu0 %v381
    %1143 = vmatpush1.msra.mxu0 %v380
    %1144 = vmatprep.subr.mxu0 %v378
    %1145 = vmatpush1.msra.mxu0 %v377
    %1146 = vmatprep.subr.mxu0 0.0
    %1147 = vmatpush2.msra.mxu0 0.0
    %1148 = vmatprep.subr.mxu0 0.0
    %1149 = vmatpush2.msra.mxu0 0.0
    %1150 = vmatprep.subr.mxu0 0.0
    %1151 = vmatpush2.msra.mxu0 0.0
    %1152 = vmatprep.subr.mxu0 0.0
    %1153 = vmatpush2.msra.mxu0 0.0
    %1154 = vmatprep.subr.mxu0 0.0
    %1155 = vmatpush2.msra.mxu0 0.0
    %1156 = vmatprep.subr.mxu0 0.0
    %1157 = vmatpush2.msra.mxu0 0.0
    %1158 = vmatprep.subr.mxu0 0.0
    %1159 = vmatpush2.msra.mxu0 0.0
    %1160 = vmatprep.subr.mxu0 0.0
    %1161 = vmatpush2.msra.mxu0 0.0
    %1162 = vmatprep.subr.mxu0 0.0
    %1163 = vmatpush2.msra.mxu0 0.0
    %1164 = vmatprep.subr.mxu0 0.0
    %1165 = vmatpush2.msra.mxu0 0.0
    %1166 = vmatprep.subr.mxu0 0.0
    %1167 = vmatpush2.msra.mxu0 0.0
    %1168 = vmatprep.subr.mxu0 0.0
    %1169 = vmatpush2.msra.mxu0 0.0
    %1170 = vmatprep.subr.mxu0 0.0
    %1171 = vmatpush2.msra.mxu0 0.0
    %1172 = vmatprep.subr.mxu0 0.0
    %1173 = vmatpush2.msra.mxu0 0.0
    %1174 = vmatprep.subr.mxu0 0.0
    %1175 = vmatpush2.msra.mxu0 0.0
    %1176 = vmatprep.subr.mxu0 0.0
    %1177 = vmatpush2.msra.mxu0 0.0
    %1178 = vmatprep.mubr.f32.mxu0 0.0
    %1179 = vmatmul.mubr.f32.gmra.mxu0 %v1107
    %v1180 = vpop.f32.mrf.mxu0
    %v1181 = vadd.f32 0.0, %v1180
    %v1182 = vpop.f32.mrf.mxu0
    %v1183 = vadd.f32 0.0, %v1182
    %1184 = vdwg.mxu0
    %1185 = vmatprep.subr.mxu0 0.0
    %1186 = vmatpush1.msra.mxu0 %v424
    %1187 = vmatprep.subr.mxu0 0.0
    %1188 = vmatpush1.msra.mxu0 %v421
    %1189 = vmatprep.subr.mxu0 0.0
    %1190 = vmatpush1.msra.mxu0 %v418
    %1191 = vmatprep.subr.mxu0 0.0
    %1192 = vmatpush1.msra.mxu0 %v415
    %1193 = vmatprep.subr.mxu0 0.0
    %1194 = vmatpush1.msra.mxu0 %v412
    %1195 = vmatprep.subr.mxu0 0.0
    %1196 = vmatpush1.msra.mxu0 %v409
    %1197 = vmatprep.subr.mxu0 0.0
    %1198 = vmatpush1.msra.mxu0 %v406
    %1199 = vmatprep.subr.mxu0 0.0
    %1200 = vmatpush1.msra.mxu0 %v403
    %1201 = vmatprep.subr.mxu0 0.0
    %1202 = vmatpush1.msra.mxu0 %v400
    %1203 = vmatprep.subr.mxu0 0.0
    %1204 = vmatpush1.msra.mxu0 %v397
    %1205 = vmatprep.subr.mxu0 0.0
    %1206 = vmatpush1.msra.mxu0 %v394
    %1207 = vmatprep.subr.mxu0 0.0
    %1208 = vmatpush1.msra.mxu0 %v391
    %1209 = vmatprep.subr.mxu0 0.0
    %1210 = vmatpush1.msra.mxu0 %v388
    %1211 = vmatprep.subr.mxu0 0.0
    %1212 = vmatpush1.msra.mxu0 %v385
    %1213 = vmatprep.subr.mxu0 0.0
    %1214 = vmatpush1.msra.mxu0 %v382
    %1215 = vmatprep.subr.mxu0 0.0
    %1216 = vmatpush1.msra.mxu0 %v379
    %1217 = vmatprep.subr.mxu0 0.0
    %1218 = vmatpush2.msra.mxu0 0.0
    %1219 = vmatprep.subr.mxu0 0.0
    %1220 = vmatpush2.msra.mxu0 0.0
    %1221 = vmatprep.subr.mxu0 0.0
    %1222 = vmatpush2.msra.mxu0 0.0
    %1223 = vmatprep.subr.mxu0 0.0
    %1224 = vmatpush2.msra.mxu0 0.0
    %1225 = vmatprep.subr.mxu0 0.0
    %1226 = vmatpush2.msra.mxu0 0.0
    %1227 = vmatprep.subr.mxu0 0.0
    %1228 = vmatpush2.msra.mxu0 0.0
    %1229 = vmatprep.subr.mxu0 0.0
    %1230 = vmatpush2.msra.mxu0 0.0
    %1231 = vmatprep.subr.mxu0 0.0
    %1232 = vmatpush2.msra.mxu0 0.0
    %1233 = vmatprep.subr.mxu0 0.0
    %1234 = vmatpush2.msra.mxu0 0.0
    %1235 = vmatprep.subr.mxu0 0.0
    %1236 = vmatpush2.msra.mxu0 0.0
    %1237 = vmatprep.subr.mxu0 0.0
    %1238 = vmatpush2.msra.mxu0 0.0
    %1239 = vmatprep.subr.mxu0 0.0
    %1240 = vmatpush2.msra.mxu0 0.0
    %1241 = vmatprep.subr.mxu0 0.0
    %1242 = vmatpush2.msra.mxu0 0.0
    %1243 = vmatprep.subr.mxu0 0.0
    %1244 = vmatpush2.msra.mxu0 0.0
    %1245 = vmatprep.subr.mxu0 0.0
    %1246 = vmatpush2.msra.mxu0 0.0
    %1247 = vmatprep.subr.mxu0 0.0
    %1248 = vmatpush2.msra.mxu0 0.0
    %1249 = vmatprep.mubr.f32.mxu0 0.0
    %1250 = vmatmul.mubr.f32.gmra.mxu0 %v1107
    %v1251 = vpop.f32.mrf.mxu0
    %v1252 = vadd.f32 0.0, %v1251
    %v1253 = vpop.f32.mrf.mxu0
    %1254 = vdwg.mxu0
    %v1255 = vadd.f32 %v1111, %v1181
    %v1256 = vxor.u32 %v1255, 2147483648
    %v1257 = vmul.f32 %v1256, 1.442695
    %v1258 = vpow.pop %v1257
    %v1259 = vadd.f32 %v1258, 1.0
    %v1260 = vrcp.pop %v1259
    %v1261 = vmul.f32 1.0, %v1260
    %v1262 = vadd.f32 %v1112, %v1183
    %v1263 = vxor.u32 %v1262, 2147483648
    %v1264 = vmul.f32 %v1263, 1.442695
    %v1265 = vpow.pop %v1264
    %v1266 = vadd.f32 %v1265, 1.0
    %v1267 = vrcp.pop %v1266
    %v1268 = vmul.f32 1.0, %v1267
    %v1269 = vadd.f32 %v1252, %v430
    %v1270 = vmul.f32 %v1261, %v1269
    %v1271 = vadd.f32 %v1113, %v1270
    %v1272 = vtanh.pop %v1271
    %v1273 = vsub.f32 1.0, %v1268
    %v1274 = vmul.f32 %v1273, %v1272
    %v1275 = vmul.f32 %v1268, %v1107
    %v1276 = vadd.f32 %v1274, %v1275
    %s1277 = smul.u32 5, 3
    %s1278 = smul.addr %s1277, 8
    %s1279 = scalar_lea.vmem [#allocation2], %s1278
    %v1280 = vld [vmem:[%s1279] sm:$0xff]
    %v1281 = vld [vmem:[%s1279 + $0x8] sm:$0xff]
    %v1282 = vld [vmem:[%s1279 + $0x10] sm:$0xff]
    %1283 = vmatprep.subr.mxu0 %v423
    %1284 = vmatpush1.msra.mxu0 %v422
    %1285 = vmatprep.subr.mxu0 %v420
    %1286 = vmatpush1.msra.mxu0 %v419
    %1287 = vmatprep.subr.mxu0 %v417
    %1288 = vmatpush1.msra.mxu0 %v416
    %1289 = vmatprep.subr.mxu0 %v414
    %1290 = vmatpush1.msra.mxu0 %v413
    %1291 = vmatprep.subr.mxu0 %v411
    %1292 = vmatpush1.msra.mxu0 %v410
    %1293 = vmatprep.subr.mxu0 %v408
    %1294 = vmatpush1.msra.mxu0 %v407
    %1295 = vmatprep.subr.mxu0 %v405
    %1296 = vmatpush1.msra.mxu0 %v404
    %1297 = vmatprep.subr.mxu0 %v402
    %1298 = vmatpush1.msra.mxu0 %v401
    %1299 = vmatprep.subr.mxu0 %v399
    %1300 = vmatpush1.msra.mxu0 %v398
    %1301 = vmatprep.subr.mxu0 %v396
    %1302 = vmatpush1.msra.mxu0 %v395
    %1303 = vmatprep.subr.mxu0 %v393
    %1304 = vmatpush1.msra.mxu0 %v392
    %1305 = vmatprep.subr.mxu0 %v390
    %1306 = vmatpush1.msra.mxu0 %v389
    %1307 = vmatprep.subr.mxu0 %v387
    %1308 = vmatpush1.msra.mxu0 %v386
    %1309 = vmatprep.subr.mxu0 %v384
    %1310 = vmatpush1.msra.mxu0 %v383
    %1311 = vmatprep.subr.mxu0 %v381
    %1312 = vmatpush1.msra.mxu0 %v380
    %1313 = vmatprep.subr.mxu0 %v378
    %1314 = vmatpush1.msra.mxu0 %v377
    %1315 = vmatprep.subr.mxu0 0.0
    %1316 = vmatpush2.msra.mxu0 0.0
    %1317 = vmatprep.subr.mxu0 0.0
    %1318 = vmatpush2.msra.mxu0 0.0
    %1319 = vmatprep.subr.mxu0 0.0
    %1320 = vmatpush2.msra.mxu0 0.0
    %1321 = vmatprep.subr.mxu0 0.0
    %1322 = vmatpush2.msra.mxu0 0.0
    %1323 = vmatprep.subr.mxu0 0.0
    %1324 = vmatpush2.msra.mxu0 0.0
    %1325 = vmatprep.subr.mxu0 0.0
    %1326 = vmatpush2.msra.mxu0 0.0
    %1327 = vmatprep.subr.mxu0 0.0
    %1328 = vmatpush2.msra.mxu0 0.0
    %1329 = vmatprep.subr.mxu0 0.0
    %1330 = vmatpush2.msra.mxu0 0.0
    %1331 = vmatprep.subr.mxu0 0.0
    %1332 = vmatpush2.msra.mxu0 0.0
    %1333 = vmatprep.subr.mxu0 0.0
    %1334 = vmatpush2.msra.mxu0 0.0
    %1335 = vmatprep.subr.mxu0 0.0
    %1336 = vmatpush2.msra.mxu0 0.0
    %1337 = vmatprep.subr.mxu0 0.0
    %1338 = vmatpush2.msra.mxu0 0.0
    %1339 = vmatprep.subr.mxu0 0.0
    %1340 = vmatpush2.msra.mxu0 0.0
    %1341 = vmatprep.subr.mxu0 0.0
    %1342 = vmatpush2.msra.mxu0 0.0
    %1343 = vmatprep.subr.mxu0 0.0
    %1344 = vmatpush2.msra.mxu0 0.0
    %1345 = vmatprep.subr.mxu0 0.0
    %1346 = vmatpush2.msra.mxu0 0.0
    %1347 = vmatprep.mubr.f32.mxu0 0.0
    %1348 = vmatmul.mubr.f32.gmra.mxu0 %v1276
    %v1349 = vpop.f32.mrf.mxu0
    %v1350 = vadd.f32 0.0, %v1349
    %v1351 = vpop.f32.mrf.mxu0
    %v1352 = vadd.f32 0.0, %v1351
    %1353 = vdwg.mxu0
    %1354 = vmatprep.subr.mxu0 0.0
    %1355 = vmatpush1.msra.mxu0 %v424
    %1356 = vmatprep.subr.mxu0 0.0
    %1357 = vmatpush1.msra.mxu0 %v421
    %1358 = vmatprep.subr.mxu0 0.0
    %1359 = vmatpush1.msra.mxu0 %v418
    %1360 = vmatprep.subr.mxu0 0.0
    %1361 = vmatpush1.msra.mxu0 %v415
    %1362 = vmatprep.subr.mxu0 0.0
    %1363 = vmatpush1.msra.mxu0 %v412
    %1364 = vmatprep.subr.mxu0 0.0
    %1365 = vmatpush1.msra.mxu0 %v409
    %1366 = vmatprep.subr.mxu0 0.0
    %1367 = vmatpush1.msra.mxu0 %v406
    %1368 = vmatprep.subr.mxu0 0.0
    %1369 = vmatpush1.msra.mxu0 %v403
    %1370 = vmatprep.subr.mxu0 0.0
    %1371 = vmatpush1.msra.mxu0 %v400
    %1372 = vmatprep.subr.mxu0 0.0
    %1373 = vmatpush1.msra.mxu0 %v397
    %1374 = vmatprep.subr.mxu0 0.0
    %1375 = vmatpush1.msra.mxu0 %v394
    %1376 = vmatprep.subr.mxu0 0.0
    %1377 = vmatpush1.msra.mxu0 %v391
    %1378 = vmatprep.subr.mxu0 0.0
    %1379 = vmatpush1.msra.mxu0 %v388
    %1380 = vmatprep.subr.mxu0 0.0
    %1381 = vmatpush1.msra.mxu0 %v385
    %1382 = vmatprep.subr.mxu0 0.0
    %1383 = vmatpush1.msra.mxu0 %v382
    %1384 = vmatprep.subr.mxu0 0.0
    %1385 = vmatpush1.msra.mxu0 %v379
    %1386 = vmatprep.subr.mxu0 0.0
    %1387 = vmatpush2.msra.mxu0 0.0
    %1388 = vmatprep.subr.mxu0 0.0
    %1389 = vmatpush2.msra.mxu0 0.0
    %1390 = vmatprep.subr.mxu0 0.0
    %1391 = vmatpush2.msra.mxu0 0.0
    %1392 = vmatprep.subr.mxu0 0.0
    %1393 = vmatpush2.msra.mxu0 0.0
    %1394 = vmatprep.subr.mxu0 0.0
    %1395 = vmatpush2.msra.mxu0 0.0
    %1396 = vmatprep.subr.mxu0 0.0
    %1397 = vmatpush2.msra.mxu0 0.0
    %1398 = vmatprep.subr.mxu0 0.0
    %1399 = vmatpush2.msra.mxu0 0.0
    %1400 = vmatprep.subr.mxu0 0.0
    %1401 = vmatpush2.msra.mxu0 0.0
    %1402 = vmatprep.subr.mxu0 0.0
    %1403 = vmatpush2.msra.mxu0 0.0
    %1404 = vmatprep.subr.mxu0 0.0
    %1405 = vmatpush2.msra.mxu0 0.0
    %1406 = vmatprep.subr.mxu0 0.0
    %1407 = vmatpush2.msra.mxu0 0.0
    %1408 = vmatprep.subr.mxu0 0.0
    %1409 = vmatpush2.msra.mxu0 0.0
    %1410 = vmatprep.subr.mxu0 0.0
    %1411 = vmatpush2.msra.mxu0 0.0
    %1412 = vmatprep.subr.mxu0 0.0
    %1413 = vmatpush2.msra.mxu0 0.0
    %1414 = vmatprep.subr.mxu0 0.0
    %1415 = vmatpush2.msra.mxu0 0.0
    %1416 = vmatprep.subr.mxu0 0.0
    %1417 = vmatpush2.msra.mxu0 0.0
    %1418 = vmatprep.mubr.f32.mxu0 0.0
    %1419 = vmatmul.mubr.f32.gmra.mxu0 %v1276
    %v1420 = vpop.f32.mrf.mxu0
    %v1421 = vadd.f32 0.0, %v1420
    %v1422 = vpop.f32.mrf.mxu0
    %1423 = vdwg.mxu0
    %v1424 = vadd.f32 %v1280, %v1350
    %v1425 = vxor.u32 %v1424, 2147483648
    %v1426 = vmul.f32 %v1425, 1.442695
    %v1427 = vpow.pop %v1426
    %v1428 = vadd.f32 %v1427, 1.0
    %v1429 = vrcp.pop %v1428
    %v1430 = vmul.f32 1.0, %v1429
    %v1431 = vadd.f32 %v1281, %v1352
    %v1432 = vxor.u32 %v1431, 2147483648
    %v1433 = vmul.f32 %v1432, 1.442695
    %v1434 = vpow.pop %v1433
    %v1435 = vadd.f32 %v1434, 1.0
    %v1436 = vrcp.pop %v1435
    %v1437 = vmul.f32 1.0, %v1436
    %v1438 = vadd.f32 %v1421, %v430
    %v1439 = vmul.f32 %v1430, %v1438
    %v1440 = vadd.f32 %v1282, %v1439
    %v1441 = vtanh.pop %v1440
    %v1442 = vsub.f32 1.0, %v1437
    %v1443 = vmul.f32 %v1442, %v1441
    %v1444 = vmul.f32 %v1437, %v1276
    %v1445 = vadd.f32 %v1443, %v1444
    %s1446 = smul.u32 6, 3
    %s1447 = smul.addr %s1446, 8
    %s1448 = scalar_lea.vmem [#allocation2], %s1447
    %v1449 = vld [vmem:[%s1448] sm:$0xff]
    %v1450 = vld [vmem:[%s1448 + $0x8] sm:$0xff]
    %v1451 = vld [vmem:[%s1448 + $0x10] sm:$0xff]
    %1452 = vmatprep.subr.mxu0 %v423
    %1453 = vmatpush1.msra.mxu0 %v422
    %1454 = vmatprep.subr.mxu0 %v420
    %1455 = vmatpush1.msra.mxu0 %v419
    %1456 = vmatprep.subr.mxu0 %v417
    %1457 = vmatpush1.msra.mxu0 %v416
    %1458 = vmatprep.subr.mxu0 %v414
    %1459 = vmatpush1.msra.mxu0 %v413
    %1460 = vmatprep.subr.mxu0 %v411
    %1461 = vmatpush1.msra.mxu0 %v410
    %1462 = vmatprep.subr.mxu0 %v408
    %1463 = vmatpush1.msra.mxu0 %v407
    %1464 = vmatprep.subr.mxu0 %v405
    %1465 = vmatpush1.msra.mxu0 %v404
    %1466 = vmatprep.subr.mxu0 %v402
    %1467 = vmatpush1.msra.mxu0 %v401
    %1468 = vmatprep.subr.mxu0 %v399
    %1469 = vmatpush1.msra.mxu0 %v398
    %1470 = vmatprep.subr.mxu0 %v396
    %1471 = vmatpush1.msra.mxu0 %v395
    %1472 = vmatprep.subr.mxu0 %v393
    %1473 = vmatpush1.msra.mxu0 %v392
    %1474 = vmatprep.subr.mxu0 %v390
    %1475 = vmatpush1.msra.mxu0 %v389
    %1476 = vmatprep.subr.mxu0 %v387
    %1477 = vmatpush1.msra.mxu0 %v386
    %1478 = vmatprep.subr.mxu0 %v384
    %1479 = vmatpush1.msra.mxu0 %v383
    %1480 = vmatprep.subr.mxu0 %v381
    %1481 = vmatpush1.msra.mxu0 %v380
    %1482 = vmatprep.subr.mxu0 %v378
    %1483 = vmatpush1.msra.mxu0 %v377
    %1484 = vmatprep.subr.mxu0 0.0
    %1485 = vmatpush2.msra.mxu0 0.0
    %1486 = vmatprep.subr.mxu0 0.0
    %1487 = vmatpush2.msra.mxu0 0.0
    %1488 = vmatprep.subr.mxu0 0.0
    %1489 = vmatpush2.msra.mxu0 0.0
    %1490 = vmatprep.subr.mxu0 0.0
    %1491 = vmatpush2.msra.mxu0 0.0
    %1492 = vmatprep.subr.mxu0 0.0
    %1493 = vmatpush2.msra.mxu0 0.0
    %1494 = vmatprep.subr.mxu0 0.0
    %1495 = vmatpush2.msra.mxu0 0.0
    %1496 = vmatprep.subr.mxu0 0.0
    %1497 = vmatpush2.msra.mxu0 0.0
    %1498 = vmatprep.subr.mxu0 0.0
    %1499 = vmatpush2.msra.mxu0 0.0
    %1500 = vmatprep.subr.mxu0 0.0
    %1501 = vmatpush2.msra.mxu0 0.0
    %1502 = vmatprep.subr.mxu0 0.0
    %1503 = vmatpush2.msra.mxu0 0.0
    %1504 = vmatprep.subr.mxu0 0.0
    %1505 = vmatpush2.msra.mxu0 0.0
    %1506 = vmatprep.subr.mxu0 0.0
    %1507 = vmatpush2.msra.mxu0 0.0
    %1508 = vmatprep.subr.mxu0 0.0
    %1509 = vmatpush2.msra.mxu0 0.0
    %1510 = vmatprep.subr.mxu0 0.0
    %1511 = vmatpush2.msra.mxu0 0.0
    %1512 = vmatprep.subr.mxu0 0.0
    %1513 = vmatpush2.msra.mxu0 0.0
    %1514 = vmatprep.subr.mxu0 0.0
    %1515 = vmatpush2.msra.mxu0 0.0
    %1516 = vmatprep.mubr.f32.mxu0 0.0
    %1517 = vmatmul.mubr.f32.gmra.mxu0 %v1445
    %v1518 = vpop.f32.mrf.mxu0
    %v1519 = vadd.f32 0.0, %v1518
    %v1520 = vpop.f32.mrf.mxu0
    %v1521 = vadd.f32 0.0, %v1520
    %1522 = vdwg.mxu0
    %1523 = vmatprep.subr.mxu0 0.0
    %1524 = vmatpush1.msra.mxu0 %v424
    %1525 = vmatprep.subr.mxu0 0.0
    %1526 = vmatpush1.msra.mxu0 %v421
    %1527 = vmatprep.subr.mxu0 0.0
    %1528 = vmatpush1.msra.mxu0 %v418
    %1529 = vmatprep.subr.mxu0 0.0
    %1530 = vmatpush1.msra.mxu0 %v415
    %1531 = vmatprep.subr.mxu0 0.0
    %1532 = vmatpush1.msra.mxu0 %v412
    %1533 = vmatprep.subr.mxu0 0.0
    %1534 = vmatpush1.msra.mxu0 %v409
    %1535 = vmatprep.subr.mxu0 0.0
    %1536 = vmatpush1.msra.mxu0 %v406
    %1537 = vmatprep.subr.mxu0 0.0
    %1538 = vmatpush1.msra.mxu0 %v403
    %1539 = vmatprep.subr.mxu0 0.0
    %1540 = vmatpush1.msra.mxu0 %v400
    %1541 = vmatprep.subr.mxu0 0.0
    %1542 = vmatpush1.msra.mxu0 %v397
    %1543 = vmatprep.subr.mxu0 0.0
    %1544 = vmatpush1.msra.mxu0 %v394
    %1545 = vmatprep.subr.mxu0 0.0
    %1546 = vmatpush1.msra.mxu0 %v391
    %1547 = vmatprep.subr.mxu0 0.0
    %1548 = vmatpush1.msra.mxu0 %v388
    %1549 = vmatprep.subr.mxu0 0.0
    %1550 = vmatpush1.msra.mxu0 %v385
    %1551 = vmatprep.subr.mxu0 0.0
    %1552 = vmatpush1.msra.mxu0 %v382
    %1553 = vmatprep.subr.mxu0 0.0
    %1554 = vmatpush1.msra.mxu0 %v379
    %1555 = vmatprep.subr.mxu0 0.0
    %1556 = vmatpush2.msra.mxu0 0.0
    %1557 = vmatprep.subr.mxu0 0.0
    %1558 = vmatpush2.msra.mxu0 0.0
    %1559 = vmatprep.subr.mxu0 0.0
    %1560 = vmatpush2.msra.mxu0 0.0
    %1561 = vmatprep.subr.mxu0 0.0
    %1562 = vmatpush2.msra.mxu0 0.0
    %1563 = vmatprep.subr.mxu0 0.0
    %1564 = vmatpush2.msra.mxu0 0.0
    %1565 = vmatprep.subr.mxu0 0.0
    %1566 = vmatpush2.msra.mxu0 0.0
    %1567 = vmatprep.subr.mxu0 0.0
    %1568 = vmatpush2.msra.mxu0 0.0
    %1569 = vmatprep.subr.mxu0 0.0
    %1570 = vmatpush2.msra.mxu0 0.0
    %1571 = vmatprep.subr.mxu0 0.0
    %1572 = vmatpush2.msra.mxu0 0.0
    %1573 = vmatprep.subr.mxu0 0.0
    %1574 = vmatpush2.msra.mxu0 0.0
    %1575 = vmatprep.subr.mxu0 0.0
    %1576 = vmatpush2.msra.mxu0 0.0
    %1577 = vmatprep.subr.mxu0 0.0
    %1578 = vmatpush2.msra.mxu0 0.0
    %1579 = vmatprep.subr.mxu0 0.0
    %1580 = vmatpush2.msra.mxu0 0.0
    %1581 = vmatprep.subr.mxu0 0.0
    %1582 = vmatpush2.msra.mxu0 0.0
    %1583 = vmatprep.subr.mxu0 0.0
    %1584 = vmatpush2.msra.mxu0 0.0
    %1585 = vmatprep.subr.mxu0 0.0
    %1586 = vmatpush2.msra.mxu0 0.0
    %1587 = vmatprep.mubr.f32.mxu0 0.0
    %1588 = vmatmul.mubr.f32.gmra.mxu0 %v1445
    %v1589 = vpop.f32.mrf.mxu0
    %v1590 = vadd.f32 0.0, %v1589
    %v1591 = vpop.f32.mrf.mxu0
    %1592 = vdwg.mxu0
    %v1593 = vadd.f32 %v1449, %v1519
    %v1594 = vxor.u32 %v1593, 2147483648
    %v1595 = vmul.f32 %v1594, 1.442695
    %v1596 = vpow.pop %v1595
    %v1597 = vadd.f32 %v1596, 1.0
    %v1598 = vrcp.pop %v1597
    %v1599 = vmul.f32 1.0, %v1598
    %v1600 = vadd.f32 %v1450, %v1521
    %v1601 = vxor.u32 %v1600, 2147483648
    %v1602 = vmul.f32 %v1601, 1.442695
    %v1603 = vpow.pop %v1602
    %v1604 = vadd.f32 %v1603, 1.0
    %v1605 = vrcp.pop %v1604
    %v1606 = vmul.f32 1.0, %v1605
    %v1607 = vadd.f32 %v1590, %v430
    %v1608 = vmul.f32 %v1599, %v1607
    %v1609 = vadd.f32 %v1451, %v1608
    %v1610 = vtanh.pop %v1609
    %v1611 = vsub.f32 1.0, %v1606
    %v1612 = vmul.f32 %v1611, %v1610
    %v1613 = vmul.f32 %v1606, %v1445
    %v1614 = vadd.f32 %v1612, %v1613
    %s1615 = smul.u32 7, 3
    %s1616 = smul.addr %s1615, 8
    %s1617 = scalar_lea.vmem [#allocation2], %s1616
    %v1618 = vld [vmem:[%s1617] sm:$0xff]
    %v1619 = vld [vmem:[%s1617 + $0x8] sm:$0xff]
    %v1620 = vld [vmem:[%s1617 + $0x10] sm:$0xff]
    %1621 = vmatprep.subr.mxu0 %v423
    %1622 = vmatpush1.msra.mxu0 %v422
    %1623 = vmatprep.subr.mxu0 %v420
    %1624 = vmatpush1.msra.mxu0 %v419
    %1625 = vmatprep.subr.mxu0 %v417
    %1626 = vmatpush1.msra.mxu0 %v416
    %1627 = vmatprep.subr.mxu0 %v414
    %1628 = vmatpush1.msra.mxu0 %v413
    %1629 = vmatprep.subr.mxu0 %v411
    %1630 = vmatpush1.msra.mxu0 %v410
    %1631 = vmatprep.subr.mxu0 %v408
    %1632 = vmatpush1.msra.mxu0 %v407
    %1633 = vmatprep.subr.mxu0 %v405
    %1634 = vmatpush1.msra.mxu0 %v404
    %1635 = vmatprep.subr.mxu0 %v402
    %1636 = vmatpush1.msra.mxu0 %v401
    %1637 = vmatprep.subr.mxu0 %v399
    %1638 = vmatpush1.msra.mxu0 %v398
    %1639 = vmatprep.subr.mxu0 %v396
    %1640 = vmatpush1.msra.mxu0 %v395
    %1641 = vmatprep.subr.mxu0 %v393
    %1642 = vmatpush1.msra.mxu0 %v392
    %1643 = vmatprep.subr.mxu0 %v390
    %1644 = vmatpush1.msra.mxu0 %v389
    %1645 = vmatprep.subr.mxu0 %v387
    %1646 = vmatpush1.msra.mxu0 %v386
    %1647 = vmatprep.subr.mxu0 %v384
    %1648 = vmatpush1.msra.mxu0 %v383
    %1649 = vmatprep.subr.mxu0 %v381
    %1650 = vmatpush1.msra.mxu0 %v380
    %1651 = vmatprep.subr.mxu0 %v378
    %1652 = vmatpush1.msra.mxu0 %v377
    %1653 = vmatprep.subr.mxu0 0.0
    %1654 = vmatpush2.msra.mxu0 0.0
    %1655 = vmatprep.subr.mxu0 0.0
    %1656 = vmatpush2.msra.mxu0 0.0
    %1657 = vmatprep.subr.mxu0 0.0
    %1658 = vmatpush2.msra.mxu0 0.0
    %1659 = vmatprep.subr.mxu0 0.0
    %1660 = vmatpush2.msra.mxu0 0.0
    %1661 = vmatprep.subr.mxu0 0.0
    %1662 = vmatpush2.msra.mxu0 0.0
    %1663 = vmatprep.subr.mxu0 0.0
    %1664 = vmatpush2.msra.mxu0 0.0
    %1665 = vmatprep.subr.mxu0 0.0
    %1666 = vmatpush2.msra.mxu0 0.0
    %1667 = vmatprep.subr.mxu0 0.0
    %1668 = vmatpush2.msra.mxu0 0.0
    %1669 = vmatprep.subr.mxu0 0.0
    %1670 = vmatpush2.msra.mxu0 0.0
    %1671 = vmatprep.subr.mxu0 0.0
    %1672 = vmatpush2.msra.mxu0 0.0
    %1673 = vmatprep.subr.mxu0 0.0
    %1674 = vmatpush2.msra.mxu0 0.0
    %1675 = vmatprep.subr.mxu0 0.0
    %1676 = vmatpush2.msra.mxu0 0.0
    %1677 = vmatprep.subr.mxu0 0.0
    %1678 = vmatpush2.msra.mxu0 0.0
    %1679 = vmatprep.subr.mxu0 0.0
    %1680 = vmatpush2.msra.mxu0 0.0
    %1681 = vmatprep.subr.mxu0 0.0
    %1682 = vmatpush2.msra.mxu0 0.0
    %1683 = vmatprep.subr.mxu0 0.0
    %1684 = vmatpush2.msra.mxu0 0.0
    %1685 = vmatprep.mubr.f32.mxu0 0.0
    %1686 = vmatmul.mubr.f32.gmra.mxu0 %v1614
    %v1687 = vpop.f32.mrf.mxu0
    %v1688 = vadd.f32 0.0, %v1687
    %v1689 = vpop.f32.mrf.mxu0
    %v1690 = vadd.f32 0.0, %v1689
    %1691 = vdwg.mxu0
    %1692 = vmatprep.subr.mxu0 0.0
    %1693 = vmatpush1.msra.mxu0 %v424
    %1694 = vmatprep.subr.mxu0 0.0
    %1695 = vmatpush1.msra.mxu0 %v421
    %1696 = vmatprep.subr.mxu0 0.0
    %1697 = vmatpush1.msra.mxu0 %v418
    %1698 = vmatprep.subr.mxu0 0.0
    %1699 = vmatpush1.msra.mxu0 %v415
    %1700 = vmatprep.subr.mxu0 0.0
    %1701 = vmatpush1.msra.mxu0 %v412
    %1702 = vmatprep.subr.mxu0 0.0
    %1703 = vmatpush1.msra.mxu0 %v409
    %1704 = vmatprep.subr.mxu0 0.0
    %1705 = vmatpush1.msra.mxu0 %v406
    %1706 = vmatprep.subr.mxu0 0.0
    %1707 = vmatpush1.msra.mxu0 %v403
    %1708 = vmatprep.subr.mxu0 0.0
    %1709 = vmatpush1.msra.mxu0 %v400
    %1710 = vmatprep.subr.mxu0 0.0
    %1711 = vmatpush1.msra.mxu0 %v397
    %1712 = vmatprep.subr.mxu0 0.0
    %1713 = vmatpush1.msra.mxu0 %v394
    %1714 = vmatprep.subr.mxu0 0.0
    %1715 = vmatpush1.msra.mxu0 %v391
    %1716 = vmatprep.subr.mxu0 0.0
    %1717 = vmatpush1.msra.mxu0 %v388
    %1718 = vmatprep.subr.mxu0 0.0
    %1719 = vmatpush1.msra.mxu0 %v385
    %1720 = vmatprep.subr.mxu0 0.0
    %1721 = vmatpush1.msra.mxu0 %v382
    %1722 = vmatprep.subr.mxu0 0.0
    %1723 = vmatpush1.msra.mxu0 %v379
    %1724 = vmatprep.subr.mxu0 0.0
    %1725 = vmatpush2.msra.mxu0 0.0
    %1726 = vmatprep.subr.mxu0 0.0
    %1727 = vmatpush2.msra.mxu0 0.0
    %1728 = vmatprep.subr.mxu0 0.0
    %1729 = vmatpush2.msra.mxu0 0.0
    %1730 = vmatprep.subr.mxu0 0.0
    %1731 = vmatpush2.msra.mxu0 0.0
    %1732 = vmatprep.subr.mxu0 0.0
    %1733 = vmatpush2.msra.mxu0 0.0
    %1734 = vmatprep.subr.mxu0 0.0
    %1735 = vmatpush2.msra.mxu0 0.0
    %1736 = vmatprep.subr.mxu0 0.0
    %1737 = vmatpush2.msra.mxu0 0.0
    %1738 = vmatprep.subr.mxu0 0.0
    %1739 = vmatpush2.msra.mxu0 0.0
    %1740 = vmatprep.subr.mxu0 0.0
    %1741 = vmatpush2.msra.mxu0 0.0
    %1742 = vmatprep.subr.mxu0 0.0
    %1743 = vmatpush2.msra.mxu0 0.0
    %1744 = vmatprep.subr.mxu0 0.0
    %1745 = vmatpush2.msra.mxu0 0.0
    %1746 = vmatprep.subr.mxu0 0.0
    %1747 = vmatpush2.msra.mxu0 0.0
    %1748 = vmatprep.subr.mxu0 0.0
    %1749 = vmatpush2.msra.mxu0 0.0
    %1750 = vmatprep.subr.mxu0 0.0
    %1751 = vmatpush2.msra.mxu0 0.0
    %1752 = vmatprep.subr.mxu0 0.0
    %1753 = vmatpush2.msra.mxu0 0.0
    %1754 = vmatprep.subr.mxu0 0.0
    %1755 = vmatpush2.msra.mxu0 0.0
    %1756 = vmatprep.mubr.f32.mxu0 0.0
    %1757 = vmatmul.mubr.f32.gmra.mxu0 %v1614
    %v1758 = vpop.f32.mrf.mxu0
    %v1759 = vadd.f32 0.0, %v1758
    %v1760 = vpop.f32.mrf.mxu0
    %1761 = vdwg.mxu0
    %v1762 = vadd.f32 %v1618, %v1688
    %v1763 = vxor.u32 %v1762, 2147483648
    %v1764 = vmul.f32 %v1763, 1.442695
    %v1765 = vpow.pop %v1764
    %v1766 = vadd.f32 %v1765, 1.0
    %v1767 = vrcp.pop %v1766
    %v1768 = vmul.f32 1.0, %v1767
    %v1769 = vadd.f32 %v1619, %v1690
    %v1770 = vxor.u32 %v1769, 2147483648
    %v1771 = vmul.f32 %v1770, 1.442695
    %v1772 = vpow.pop %v1771
    %v1773 = vadd.f32 %v1772, 1.0
    %v1774 = vrcp.pop %v1773
    %v1775 = vmul.f32 1.0, %v1774
    %v1776 = vadd.f32 %v1759, %v430
    %v1777 = vmul.f32 %v1768, %v1776
    %v1778 = vadd.f32 %v1620, %v1777
    %v1779 = vtanh.pop %v1778
    %v1780 = vsub.f32 1.0, %v1775
    %v1781 = vmul.f32 %v1780, %v1779
    %v1782 = vmul.f32 %v1775, %v1614
    %v1783 = vadd.f32 %v1781, %v1782
    %1784 = vst [vmem:[#allocation9] sm:$0xff] %v1783
    // Predicated region
    $region34: #{tpu_custom_call.1} parent=1 // pred_check
      _
    $region35: #{tpu_custom_call.1} parent=1 // pred_check_branch
      %1786 = sbr.rel (0) target = $region37
    $region36: #{tpu_custom_call.1} parent=1 // pred_region
      %s1788 = ssub.s32 128, 128
      %1789 = vsyncadd [#allocation5], %s1788
      %s1791 = sshll.u32 [#allocation9], 4
      %s1792 = int_to_ptr.vmem [resolvable:$true] %s1791
      %1794 = dma.vmem_to_hbm [thread:$0]  %s1792, 128, %s5, [#allocation5]
    $region37: #{tpu_custom_call.1} parent=1 // pred_fallthru
      _
    // Predicated region
    $region38: #{tpu_custom_call.1} parent=1 // pred_check
      _
    $region39: #{tpu_custom_call.1} parent=1 // pred_check_branch
      %1796 = sbr.rel (0) target = $region41
    $region40: #{tpu_custom_call.1} parent=1 // pred_region
      %1797 = dma.done [#allocation5], 128
    $region41: #{tpu_custom_call.1} parent=1 // pred_fallthru
      _
    %1798 = vsyncpa [#allocation4], 1
    %1799 = vsyncpa [#allocation7], 1
    %1800 = vsyncpa [#allocation5], 1

</llo_original>
